<compile_context>
chip_gen: v7x
topology: tpu7x:2x2x1
jax: 0.10.0
libtpu: 0.0.40
codegen_flags: <defaults>
</compile_context>

<pallas_src>
import math

import jax
import jax.numpy as jnp
from jax import lax
from jax.experimental import pallas as pl
from jax.experimental.pallas import tpu as pltpu


# ------------------------------ helpers -------------------------------------


def _softplus(x):
    # Numerically safe softplus built only from exp/log/where (Mosaic-safe).
    return jnp.where(x > 20.0, x, jnp.log(1.0 + jnp.exp(jnp.minimum(x, 20.0))))


def _silu(x):
    return x * pl.reciprocal(1.0 + jnp.exp(-x), approx=True)


def _layernorm(x, g, b, eps):
    mu = jnp.mean(x, axis=-1, keepdims=True)
    var = jnp.mean((x - mu) ** 2, axis=-1, keepdims=True)
    return (x - mu) * lax.rsqrt(var + eps) * g + b


# ------------------------------ kernels -------------------------------------


def ln_inproj_kernel(x_ref, g_ref, b_ref, w_ref, xo_ref, zo_ref):
    # x: (tm, C) f32, g/b: (1, C), w: (C, 2*Di) bf16, outputs: (tm, Di) bf16
    Di = xo_ref.shape[-1]
    x = x_ref[...].astype(jnp.float32)
    xn = _layernorm(x, g_ref[...], b_ref[...], 1e-6)          # ln_1, eps=1e-6
    xz = jnp.dot(xn.astype(jnp.bfloat16), w_ref[...],
                 preferred_element_type=jnp.float32)          # (tm, 2*Di)
    xo_ref[...] = xz[:, :Di].astype(xo_ref.dtype)
    zo_ref[...] = xz[:, Di:].astype(zo_ref.dtype)


_HALO = 8  # sublane-aligned halo width in the padded conv scratch


def dwconv_silu_kernel(x_ref, w_ref, b_ref, o_ref, xpad_ref):
    # x: (H, W, Di) bf16, w: (3, 3, Di) f32, b: (1, Di) f32, out bf16
    H, W, Di = x_ref.shape
    Hp, Wp, _ = xpad_ref.shape
    # Re-zero only the halo border each step (the interior is fully
    # overwritten below); safe under any megacore grid partitioning.
    zrow = jnp.zeros((1, Wp, Di), jnp.float32)
    xpad_ref[0:1, :, :] = zrow
    xpad_ref[Hp - 1:Hp, :, :] = zrow
    zcol = jnp.zeros((H, _HALO, Di), jnp.float32)
    xpad_ref[1:H + 1, 0:_HALO, :] = zcol
    xpad_ref[1:H + 1, _HALO + W:Wp, :] = zcol
    # interior store (sublane offset _HALO is 8-aligned)
    xpad_ref[1:H + 1, _HALO:_HALO + W, :] = x_ref[...].astype(jnp.float32)

    xp = xpad_ref[...]
    wv = w_ref[...]
    acc = jnp.zeros((H, W, Di), jnp.float32)
    for kh in range(3):
        for kw in range(3):
            c0 = _HALO - 1 + kw
            acc = acc + xp[kh:kh + H, c0:c0 + W, :] * wv[kh, kw]
    acc = acc + b_ref[...]
    o_ref[...] = _silu(acc).astype(o_ref.dtype)


def ssm_kernel(x_ref, w_ref, dtb_ref, a_ref, d_ref, y_ref,
               fa_s, fb_s, fh_s, ra_s, rb_s, rh_s):
    """One (batch, direction-group) program: forward + reverse selective scan
    over one ordering of the image sequence.

    x_ref : (L, Di) bf16 input sequence (conv output, this group's order)
    w_ref : (2, Di, Di+2N) bf16 combined x_proj/dt_proj weights [fwd, rev]
    dtb/a/d : (2, 1, Di) / (2, N, Di) / (2, 1, Di) f32  [fwd, rev]
    y_ref : (L, Di) f32, sum of both directions' outputs (original order)
    scratches: (T, N, Di) f32 — state-minor layout, Di on the lane axis.
    """
    L, Di = x_ref.shape
    T, N, _ = fa_s.shape
    num_chunks = L // T

    # D*u skip terms of both directions in this group.
    y_ref[...] = x_ref[...].astype(jnp.float32) * (d_ref[0] + d_ref[1])

    w_f, w_r = w_ref[0], w_ref[1]
    a_f, a_r = a_ref[0], a_ref[1]
    dtb_f, dtb_r = dtb_ref[0], dtb_ref[1]

    def project(start, w, dtb, a_mat, dA_ref, dBu_ref):
        # Fused x_proj + dt_proj for one chunk: single (T,Di)@(Di,Di+2N) MXU op.
        u16 = x_ref[pl.ds(start, T), :]
        proj = jnp.dot(u16, w, preferred_element_type=jnp.float32)
        delta = _softplus(proj[:, :Di] + dtb)                     # (T, Di)
        b_c = proj[:, Di:Di + N]                                  # (T, N)
        c_c = proj[:, Di + N:Di + 2 * N]                          # (T, N)
        dA_ref[...] = jnp.exp(delta[:, None, :] * a_mat[None, :, :])
        dBu_ref[...] = (delta * u16.astype(jnp.float32))[:, None, :] \
            * b_c[:, :, None]
        return c_c

    def contract(h_ref, c_c):
        # y[t, :] = sum_n h[t, n, :] * c[t, n]  -> N lane-dense FMAs on (T, Di)
        y = h_ref[:, 0, :] * c_c[:, 0:1]
        for n in range(1, N):
            y = y + h_ref[:, n, :] * c_c[:, n:n + 1]
        return y

    def chunk_body(c, carry):
        h_f, h_r = carry
        off = pl.multiple_of(c * T, T)                 # forward chunk start
        roff = pl.multiple_of(L - T - c * T, T)        # reverse chunk start

        c_f = project(off, w_f, dtb_f, a_f, fa_s, fb_s)
        c_r = project(roff, w_r, dtb_r, a_r, ra_s, rb_s)

        def step(t, hs):
            hf, hr = hs
            loc = T - 1 - t
            hf = fa_s[pl.ds(t, 1)] * hf + fb_s[pl.ds(t, 1)]
            fh_s[pl.ds(t, 1)] = hf
            hr = ra_s[pl.ds(loc, 1)] * hr + rb_s[pl.ds(loc, 1)]
            rh_s[pl.ds(loc, 1)] = hr
            return (hf, hr)

        h_f, h_r = lax.fori_loop(0, T, step, (h_f, h_r), unroll=8)

        y_ref[pl.ds(off, T), :] = y_ref[pl.ds(off, T), :] + contract(fh_s, c_f)
        y_ref[pl.ds(roff, T), :] = y_ref[pl.ds(roff, T), :] + contract(rh_s, c_r)
        return (h_f, h_r)

    h0 = jnp.zeros((1, N, Di), jnp.float32)
    lax.fori_loop(0, num_chunks, chunk_body, (h0, h0))


def merge_out_kernel(yhw_ref, ywh_ref, z_ref, g_ref, b_ref, w_ref, o_ref):
    # yhw/ywh: (tm, Di) f32, z: (tm, Di) bf16, w: (Di, C) bf16, out: (tm, C) f32
    y = yhw_ref[...] + ywh_ref[...]
    yn = _layernorm(y, g_ref[...], b_ref[...], 1e-5)          # out_norm, eps=1e-5
    gate = _silu(z_ref[...].astype(jnp.float32))
    o_ref[...] = jnp.dot((yn * gate).astype(jnp.bfloat16), w_ref[...],
                         preferred_element_type=jnp.float32)


# --------------------------- pallas_call wrappers ----------------------------


def _row_tile(m):
    # largest row tile <= 1024 that divides m
    for t in (1024, 512, 256, 128, 64, 32, 16, 8):
        if m % t == 0:
            return t
    return m


def _pick_chunk(L, cap=128):
    # largest divisor of L <= cap, preferring multiples of 8
    best = None
    for t in range(min(cap, L), 0, -1):
        if L % t == 0:
            if t % 8 == 0:
                return t
            if best is None:
                best = t
    return best if best is not None else L


def ln_inproj_call(x, g, b, w_in_t):
    M, C = x.shape
    Di2 = w_in_t.shape[1]
    Di = Di2 // 2
    tm = _row_tile(M)
    return pl.pallas_call(
        ln_inproj_kernel,
        out_shape=(jax.ShapeDtypeStruct((M, Di), jnp.bfloat16),
                   jax.ShapeDtypeStruct((M, Di), jnp.bfloat16)),
        grid=(M // tm,),
        in_specs=[pl.BlockSpec((tm, C), lambda i: (i, 0)),
                  pl.BlockSpec((1, C), lambda i: (0, 0)),
                  pl.BlockSpec((1, C), lambda i: (0, 0)),
                  pl.BlockSpec((C, Di2), lambda i: (0, 0))],
        out_specs=(pl.BlockSpec((tm, Di), lambda i: (i, 0)),
                   pl.BlockSpec((tm, Di), lambda i: (i, 0))),
        compiler_params=pltpu.CompilerParams(dimension_semantics=("parallel",)),
    )(x, g, b, w_in_t)


def dwconv_call(x, w, b):
    B, H, W, Di = x.shape
    return pl.pallas_call(
        dwconv_silu_kernel,
        out_shape=jax.ShapeDtypeStruct((B, H, W, Di), jnp.bfloat16),
        grid=(B,),
        in_specs=[pl.BlockSpec((None, H, W, Di), lambda i: (i, 0, 0, 0)),
                  pl.BlockSpec((3, 3, Di), lambda i: (0, 0, 0)),
                  pl.BlockSpec((1, Di), lambda i: (0, 0))],
        out_specs=pl.BlockSpec((None, H, W, Di), lambda i: (i, 0, 0, 0)),
        scratch_shapes=[pltpu.VMEM((H + 2, W + 2 * _HALO, Di), jnp.float32)],
        compiler_params=pltpu.CompilerParams(
            dimension_semantics=("parallel",),
            vmem_limit_bytes=56 * 1024 * 1024),
    )(x, w, b)


def ssm_call(x_stk, wcomb_t, dtb, a_t, dp):
    B, G, L, Di = x_stk.shape
    N = a_t.shape[1]
    Dproj = wcomb_t.shape[-1]
    T = _pick_chunk(L)
    return pl.pallas_call(
        ssm_kernel,
        out_shape=jax.ShapeDtypeStruct((B, 2, L, Di), jnp.float32),
        grid=(B, 2),
        in_specs=[pl.BlockSpec((None, None, L, Di), lambda b, g: (b, g, 0, 0)),
                  pl.BlockSpec((2, Di, Dproj), lambda b, g: (g, 0, 0)),
                  pl.BlockSpec((2, 1, Di), lambda b, g: (g, 0, 0)),
                  pl.BlockSpec((2, N, Di), lambda b, g: (g, 0, 0)),
                  pl.BlockSpec((2, 1, Di), lambda b, g: (g, 0, 0))],
        out_specs=pl.BlockSpec((None, None, L, Di), lambda b, g: (b, g, 0, 0)),
        scratch_shapes=[pltpu.VMEM((T, N, Di), jnp.float32) for _ in range(6)],
        compiler_params=pltpu.CompilerParams(
            dimension_semantics=("parallel", "parallel"),
            vmem_limit_bytes=56 * 1024 * 1024),
    )(x_stk, wcomb_t, dtb, a_t, dp)


def merge_out_call(yhw, ywh_t, z, g, b, w_out_t):
    M, Di = yhw.shape
    C = w_out_t.shape[1]
    tm = _row_tile(M)
    return pl.pallas_call(
        merge_out_kernel,
        out_shape=jax.ShapeDtypeStruct((M, C), jnp.float32),
        grid=(M // tm,),
        in_specs=[pl.BlockSpec((tm, Di), lambda i: (i, 0)),
                  pl.BlockSpec((tm, Di), lambda i: (i, 0)),
                  pl.BlockSpec((tm, Di), lambda i: (i, 0)),
                  pl.BlockSpec((1, Di), lambda i: (0, 0)),
                  pl.BlockSpec((1, Di), lambda i: (0, 0)),
                  pl.BlockSpec((Di, C), lambda i: (0, 0))],
        out_specs=pl.BlockSpec((tm, C), lambda i: (i, 0)),
        compiler_params=pltpu.CompilerParams(dimension_semantics=("parallel",)),
    )(yhw, ywh_t, z, g, b, w_out_t)


# ------------------------- params + forward glue -----------------------------


def make_params(key, d_model, d_state=16, expand=2.0,
                dt_min=0.001, dt_max=0.1, dt_init_floor=1e-4):
    Di = int(expand * d_model)
    R = math.ceil(d_model / 16)
    N = d_state
    K = 4
    ks = jax.random.split(key, 8)
    p = {"d_inner": Di, "d_state": N, "dt_rank": R}

    # VSSBlock.ln_1 (eps=1e-6)
    p["ln1_g"] = jnp.ones((1, d_model), jnp.float32)
    p["ln1_b"] = jnp.zeros((1, d_model), jnp.float32)

    # SS2D.in_proj (bias=False): torch weight (2*Di, d_model) -> fused W.T
    w_in = jax.random.normal(ks[0], (2 * Di, d_model), jnp.float32) * 0.1
    p["w_in_t"] = w_in.T.astype(jnp.bfloat16)                      # (C, 2*Di)

    # SS2D.conv2d depthwise 3x3 with bias: torch weight (Di, 1, 3, 3)
    w_conv = jax.random.normal(ks[1], (Di, 1, 3, 3), jnp.float32) * 0.1
    p["conv_w"] = jnp.transpose(w_conv[:, 0], (1, 2, 0))           # (3, 3, Di)
    p["conv_b"] = (jax.random.normal(ks[2], (Di,), jnp.float32) * 0.1
                   ).reshape(1, Di)

    # x_proj_weight (K, R+2N, Di) and dt_projs_weight (K, Di, R); fold the
    # dt projection into the delta rows so the scan does a single
    # (T, Di) @ (Di, Di+2N) matmul per direction per chunk.
    x_proj_w = jax.random.normal(ks[3], (K, R + 2 * N, Di), jnp.float32) * 0.1
    std = R ** -0.5
    dt_w = jax.random.uniform(ks[4], (K, Di, R), jnp.float32,
                              minval=-std, maxval=std)
    wcomb = []
    for k in range(K):
        m_delta = (dt_w[k] @ x_proj_w[k][:R]).T                    # (Di, Di)
        wb = x_proj_w[k][R:R + N].T                                # (Di, N)
        wc = x_proj_w[k][R + N:R + 2 * N].T                        # (Di, N)
        wcomb.append(jnp.concatenate([m_delta, wb, wc], axis=1))
    wcomb = jnp.stack(wcomb)                                       # (K, Di, Di+2N)

    # dt_projs_bias (inv_dt init), A = -exp(A_logs), D = ones
    dt = jnp.exp(jax.random.uniform(ks[5], (K, Di), jnp.float32)
                 * (math.log(dt_max) - math.log(dt_min)) + math.log(dt_min))
    dt = jnp.maximum(dt, dt_init_floor)
    inv_dt = dt + jnp.log(-jnp.expm1(-dt))
    dtb = inv_dt.reshape(K, 1, Di)
    a_neg = -jnp.tile(jnp.arange(1, N + 1, dtype=jnp.float32)[None, None, :],
                      (K, Di, 1))                                  # -exp(log(1..N))
    a_t = jnp.transpose(a_neg, (0, 2, 1))                          # (K, N, Di)
    dp = jnp.ones((K, 1, Di), jnp.float32)

    # Reorder the direction axis into groups:
    #   group 0 = (dir0 forward, dir2 reverse) on the H-major sequence
    #   group 1 = (dir1 forward, dir3 reverse) on the W-major sequence
    order = (0, 2, 1, 3)
    p["wcomb_t"] = jnp.stack([wcomb[i] for i in order]).astype(jnp.bfloat16)
    p["dtb"] = jnp.stack([dtb[i] for i in order])
    p["a_t"] = jnp.stack([a_t[i] for i in order])
    p["dp"] = jnp.stack([dp[i] for i in order])

    # out_norm (eps=1e-5) and out_proj (bias=False)
    p["out_norm_g"] = jnp.ones((1, Di), jnp.float32)
    p["out_norm_b"] = jnp.zeros((1, Di), jnp.float32)
    w_out = jax.random.normal(ks[6], (d_model, Di), jnp.float32) * 0.1
    p["w_out_t"] = w_out.T.astype(jnp.bfloat16)
    # skip_scale / skip_scale2 exist in __init__ but are unused in forward.
    return p


def vss_block_forward(x_nchw, p):
    # TODO(synk): DropPath / Dropout are identity at rate 0.0 and are omitted.
    B, C, H, W = x_nchw.shape
    L = H * W
    M = B * L
    Di = p["d_inner"]

    # VSSBlock: NCHW -> NHWC, then ln_1 + SS2D.in_proj (fused, M-tiled)
    xin = jnp.transpose(x_nchw, (0, 2, 3, 1)).astype(jnp.float32).reshape(M, C)
    x_part, z = ln_inproj_call(xin, p["ln1_g"], p["ln1_b"], p["w_in_t"])

    # depthwise 3x3 conv + SiLU (halo handled inside the kernel)
    xconv = dwconv_call(x_part.reshape(B, H, W, Di), p["conv_w"], p["conv_b"])

    # the two scan orderings; reverse scans are handled inside the SSM kernel
    x_hw = xconv.reshape(B, L, Di)                                  # H-major
    x_wh = jnp.transpose(xconv, (0, 2, 1, 3)).reshape(B, L, Di)     # W-major
    x_stk = jnp.stack([x_hw, x_wh], axis=1)                         # (B, 2, L, Di)

    y = ssm_call(x_stk, p["wcomb_t"], p["dtb"], p["a_t"], p["dp"])  # (B,2,L,Di)

    yhw = y[:, 0].reshape(M, Di)
    ywh_t = jnp.transpose(y[:, 1].reshape(B, W, H, Di),
                          (0, 2, 1, 3)).reshape(M, Di)              # back to H-major

    # sum + out_norm + SiLU(z) gate + out_proj (fused, M-tiled)
    out = merge_out_call(yhw, ywh_t, z, p["out_norm_g"], p["out_norm_b"],
                         p["w_out_t"])                              # (M, C)
    out = out.reshape(B, H, W, C)
    return jnp.transpose(out, (0, 3, 1, 2))                         # back to NCHW


if __name__ == "__main__":
    key = jax.random.PRNGKey(0)
    k_x, k_p = jax.random.split(key)

    B, C, H, W = 2, 4, 16, 16                 # hidden_dim=4, d_state=16, expand=2
    x = jax.random.normal(k_x, (B, C, H, W), jnp.float32)
    params = make_params(k_p, d_model=C, d_state=16, expand=2.0)

    out = vss_block_forward(x, params)
    out = jax.block_until_ready(out)

    assert out.shape == (B, C, H, W), out.shape
    assert out.dtype == jnp.float32
    assert bool(jnp.all(jnp.isfinite(out)))
    print("KERNEL_OK")
</pallas_src>

<mosaic_0001>
module attributes {stable_mosaic.version = 11 : i64} {
  func.func @ln_inproj_kernel(%arg0: i32, %arg1: memref<512x4xf32, #tpu.memory_space<vmem>>, %arg2: memref<1x4xf32, #tpu.memory_space<vmem>>, %arg3: memref<1x4xf32, #tpu.memory_space<vmem>>, %arg4: memref<4x16xbf16, #tpu.memory_space<vmem>>, %arg5: memref<512x8xbf16, #tpu.memory_space<vmem>>, %arg6: memref<512x8xbf16, #tpu.memory_space<vmem>>) attributes {dimension_semantics = [#tpu.dimension_semantics<parallel>], iteration_bounds = array<i64: 1>, scalar_prefetch = 0 : i64, scratch_operands = 0 : i64, tpu.core_type = #tpu.core_type<tc>, window_params = [{transform_indices = @transform_0, window_bounds = array<i64: 512, 4>}, {pipeline_mode = #tpu.pipeline_mode<synchronous>, transform_indices = @transform_1, window_bounds = array<i64: 1, 4>}, {pipeline_mode = #tpu.pipeline_mode<synchronous>, transform_indices = @transform_2, window_bounds = array<i64: 1, 4>}, {pipeline_mode = #tpu.pipeline_mode<synchronous>, transform_indices = @transform_3, window_bounds = array<i64: 4, 16>}, {transform_indices = @transform_4, window_bounds = array<i64: 512, 8>}, {transform_indices = @transform_5, window_bounds = array<i64: 512, 8>}]} {
    %c0 = arith.constant 0 : index
    %c0_0 = arith.constant 0 : index
    %0 = vector.load %arg1[%c0, %c0_0] : memref<512x4xf32, #tpu.memory_space<vmem>>, vector<512x4xf32>
    %c0_1 = arith.constant 0 : index
    %c0_2 = arith.constant 0 : index
    %1 = vector.load %arg2[%c0_1, %c0_2] : memref<1x4xf32, #tpu.memory_space<vmem>>, vector<1x4xf32>
    %c0_3 = arith.constant 0 : index
    %c0_4 = arith.constant 0 : index
    %2 = vector.load %arg3[%c0_3, %c0_4] : memref<1x4xf32, #tpu.memory_space<vmem>>, vector<1x4xf32>
    %cst = arith.constant dense<0.000000e+00> : vector<512xf32>
    %3 = vector.multi_reduction <add>, %0, %cst [1] : vector<512x4xf32> to vector<512xf32>
    %4 = vector.shape_cast %3 : vector<512xf32> to vector<512x1xf32>
    %cst_5 = arith.constant 4.000000e+00 : f32
    %5 = vector.broadcast %cst_5 : f32 to vector<512x1xf32>
    %6 = arith.divf %4, %5 : vector<512x1xf32>
    %7 = vector.broadcast %6 : vector<512x1xf32> to vector<512x4xf32>
    %8 = arith.subf %0, %7 : vector<512x4xf32>
    %9 = arith.mulf %8, %8 : vector<512x4xf32>
    %cst_6 = arith.constant dense<0.000000e+00> : vector<512xf32>
    %10 = vector.multi_reduction <add>, %9, %cst_6 [1] : vector<512x4xf32> to vector<512xf32>
    %11 = vector.shape_cast %10 : vector<512xf32> to vector<512x1xf32>
    %cst_7 = arith.constant 4.000000e+00 : f32
    %12 = vector.broadcast %cst_7 : f32 to vector<512x1xf32>
    %13 = arith.divf %11, %12 : vector<512x1xf32>
    %14 = vector.broadcast %6 : vector<512x1xf32> to vector<512x4xf32>
    %15 = arith.subf %0, %14 : vector<512x4xf32>
    %cst_8 = arith.constant 9.99999997E-7 : f32
    %16 = vector.broadcast %cst_8 : f32 to vector<512x1xf32>
    %17 = arith.addf %13, %16 : vector<512x1xf32>
    %18 = math.rsqrt %17 : vector<512x1xf32>
    %19 = vector.broadcast %18 : vector<512x1xf32> to vector<512x4xf32>
    %20 = arith.mulf %15, %19 : vector<512x4xf32>
    %21 = vector.broadcast %1 : vector<1x4xf32> to vector<512x4xf32>
    %22 = arith.mulf %20, %21 : vector<512x4xf32>
    %23 = vector.broadcast %2 : vector<1x4xf32> to vector<512x4xf32>
    %24 = arith.addf %22, %23 : vector<512x4xf32>
    %25 = arith.truncf %24 : vector<512x4xf32> to vector<512x4xbf16>
    %c0_9 = arith.constant 0 : index
    %c0_10 = arith.constant 0 : index
    %26 = vector.load %arg4[%c0_9, %c0_10] : memref<4x16xbf16, #tpu.memory_space<vmem>>, vector<4x16xbf16>
    %cst_11 = arith.constant dense<0.000000e+00> : vector<512x16xf32>
    %27 = tpu.matmul %25, %26, %cst_11 {dimension_numbers = #tpu.dot_dimension_numbers<[1], [0], [0], [1], [0, 0, 1, 1], [], []>} : vector<512x4xbf16>, vector<4x16xbf16>, vector<512x16xf32> -> vector<512x16xf32>
    %28 = vector.extract_strided_slice %27 {offsets = [0, 0], sizes = [512, 8], strides = [1, 1]} : vector<512x16xf32> to vector<512x8xf32>
    %29 = arith.truncf %28 : vector<512x8xf32> to vector<512x8xbf16>
    %c0_12 = arith.constant 0 : index
    %c0_13 = arith.constant 0 : index
    %30 = vector.load %arg5[%c0_12, %c0_13] : memref<512x8xbf16, #tpu.memory_space<vmem>>, vector<512x8xbf16>
    tpu.vector_store %arg5[%c0_12, %c0_13], %29 {strides = array<i32>} : memref<512x8xbf16, #tpu.memory_space<vmem>>, vector<512x8xbf16>,
    %31 = vector.extract_strided_slice %27 {offsets = [0, 8], sizes = [512, 8], strides = [1, 1]} : vector<512x16xf32> to vector<512x8xf32>
    %32 = arith.truncf %31 : vector<512x8xf32> to vector<512x8xbf16>
    %c0_14 = arith.constant 0 : index
    %c0_15 = arith.constant 0 : index
    %33 = vector.load %arg6[%c0_14, %c0_15] : memref<512x8xbf16, #tpu.memory_space<vmem>>, vector<512x8xbf16>
    tpu.vector_store %arg6[%c0_14, %c0_15], %32 {strides = array<i32>} : memref<512x8xbf16, #tpu.memory_space<vmem>>, vector<512x8xbf16>,
    return
  }
  func.func @transform_0(%arg0: i32) -> (i32, i32) {
    %c0_i32 = arith.constant 0 : i32
    %c0_i32_0 = arith.constant 0 : i32
    return %arg0, %c0_i32 : i32, i32
  }
  func.func @transform_1(%arg0: i32) -> (i32, i32) {
    %c0_i32 = arith.constant 0 : i32
    %c0_i32_0 = arith.constant 0 : i32
    %c0_i32_1 = arith.constant 0 : i32
    return %c0_i32, %c0_i32_0 : i32, i32
  }
  func.func @transform_2(%arg0: i32) -> (i32, i32) {
    %c0_i32 = arith.constant 0 : i32
    %c0_i32_0 = arith.constant 0 : i32
    %c0_i32_1 = arith.constant 0 : i32
    return %c0_i32, %c0_i32_0 : i32, i32
  }
  func.func @transform_3(%arg0: i32) -> (i32, i32) {
    %c0_i32 = arith.constant 0 : i32
    %c0_i32_0 = arith.constant 0 : i32
    %c0_i32_1 = arith.constant 0 : i32
    return %c0_i32, %c0_i32_0 : i32, i32
  }
  func.func @transform_4(%arg0: i32) -> (i32, i32) {
    %c0_i32 = arith.constant 0 : i32
    %c0_i32_0 = arith.constant 0 : i32
    return %arg0, %c0_i32 : i32, i32
  }
  func.func @transform_5(%arg0: i32) -> (i32, i32) {
    %c0_i32 = arith.constant 0 : i32
    %c0_i32_0 = arith.constant 0 : i32
    return %arg0, %c0_i32 : i32, i32
  }
}

</mosaic_0001>

<llo_original>
// kernel: tpu_custom_call.1
$region0: #{tpu_custom_call.1}
  #allocation0 [shape = 'u32[]', space=smem, size = 0x4, offset = 0x4, fixed_abs, tag = 'smem constant byte address 0x4 - core index']
  #allocation1 [shape = 'u32[144,128]{1,0:T(1,128)}', space=vmem, size = 0x12000, scoped, tag = 'internal scratch']
  %s0 = inlined_call_operand.vmem [shape: f32[512,4], index: 0, kind: input, shape index: {}]
  %s1 = inlined_call_operand.vmem [shape: f32[1,4], index: 1, kind: input, shape index: {}]
  %s2 = inlined_call_operand.vmem [shape: f32[1,4], index: 2, kind: input, shape index: {}]
  %s3 = inlined_call_operand.vmem [shape: bf16[4,16], index: 3, kind: input, shape index: {}]
  %s4 = inlined_call_operand.vmem [shape: bf16[512,8], index: 4, kind: output, shape index: {0}]
  %s5 = inlined_call_operand.vmem [shape: bf16[512,8], index: 5, kind: output, shape index: {1}]
  %6 = xla_tuple %s4, %s5
  %s7 = sld [smem:[#allocation0]]
  $region34: #{tpu_custom_call.1} parent=0
    _
  %s9 = ssub.s32 1, %s7
  %s10 = scalar_select 0, %s9, %s7
  // Predicated region
  $region2: #{tpu_custom_call.1} parent=0 // pred_check
    _
  $region3: #{tpu_custom_call.1} parent=0 // pred_check_branch
    %12 = sbr.rel (0) target = $region5
  $region4: #{tpu_custom_call.1} parent=0 // pred_region
    _
  $region5: #{tpu_custom_call.1} parent=0 // pred_fallthru
    _
  // Predicated region
  $region6: #{tpu_custom_call.1} parent=0 // pred_check
    _
  $region7: #{tpu_custom_call.1} parent=0 // pred_check_branch
    %14 = sbr.rel (0) target = $region9
  $region8: #{tpu_custom_call.1} parent=0 // pred_region
    _
  $region9: #{tpu_custom_call.1} parent=0 // pred_fallthru
    _
  // Predicated region
  $region10: #{tpu_custom_call.1} parent=0 // pred_check
    _
  $region11: #{tpu_custom_call.1} parent=0 // pred_check_branch
    %16 = sbr.rel (0) target = $region13
  $region12: #{tpu_custom_call.1} parent=0 // pred_region
    _
  $region13: #{tpu_custom_call.1} parent=0 // pred_fallthru
    _
  // Predicated region
  $region14: #{tpu_custom_call.1} parent=0 // pred_check
    _
  $region15: #{tpu_custom_call.1} parent=0 // pred_check_branch
    %18 = sbr.rel (0) target = $region17
  $region16: #{tpu_custom_call.1} parent=0 // pred_region
    _
  $region17: #{tpu_custom_call.1} parent=0 // pred_fallthru
    _
  %v20 = vld [vmem:[%s0] sm:$0xff]
  %v21 = vld [vmem:[%s0 + $0x8] sm:$0xff]
  %v22 = vld [vmem:[%s0 + $0x10] sm:$0xff]
  %v23 = vld [vmem:[%s0 + $0x18] sm:$0xff]
  %v24 = vld [vmem:[%s0 + $0x20] sm:$0xff]
  %v25 = vld [vmem:[%s0 + $0x28] sm:$0xff]
  %v26 = vld [vmem:[%s0 + $0x30] sm:$0xff]
  %v27 = vld [vmem:[%s0 + $0x38] sm:$0xff]
  %v28 = vld [vmem:[%s0 + $0x40] sm:$0xff]
  %v29 = vld [vmem:[%s0 + $0x48] sm:$0xff]
  %v30 = vld [vmem:[%s0 + $0x50] sm:$0xff]
  %v31 = vld [vmem:[%s0 + $0x58] sm:$0xff]
  %v32 = vld [vmem:[%s0 + $0x60] sm:$0xff]
  %v33 = vld [vmem:[%s0 + $0x68] sm:$0xff]
  %v34 = vld [vmem:[%s0 + $0x70] sm:$0xff]
  %v35 = vld [vmem:[%s0 + $0x78] sm:$0xff]
  %v36 = vld [vmem:[%s0 + $0x80] sm:$0xff]
  %v37 = vld [vmem:[%s0 + $0x88] sm:$0xff]
  %v38 = vld [vmem:[%s0 + $0x90] sm:$0xff]
  %v39 = vld [vmem:[%s0 + $0x98] sm:$0xff]
  %v40 = vld [vmem:[%s0 + $0xa0] sm:$0xff]
  %v41 = vld [vmem:[%s0 + $0xa8] sm:$0xff]
  %v42 = vld [vmem:[%s0 + $0xb0] sm:$0xff]
  %v43 = vld [vmem:[%s0 + $0xb8] sm:$0xff]
  %v44 = vld [vmem:[%s0 + $0xc0] sm:$0xff]
  %v45 = vld [vmem:[%s0 + $0xc8] sm:$0xff]
  %v46 = vld [vmem:[%s0 + $0xd0] sm:$0xff]
  %v47 = vld [vmem:[%s0 + $0xd8] sm:$0xff]
  %v48 = vld [vmem:[%s0 + $0xe0] sm:$0xff]
  %v49 = vld [vmem:[%s0 + $0xe8] sm:$0xff]
  %v50 = vld [vmem:[%s0 + $0xf0] sm:$0xff]
  %v51 = vld [vmem:[%s0 + $0xf8] sm:$0xff]
  %v52 = vld [vmem:[%s0 + $0x100] sm:$0xff]
  %v53 = vld [vmem:[%s0 + $0x108] sm:$0xff]
  %v54 = vld [vmem:[%s0 + $0x110] sm:$0xff]
  %v55 = vld [vmem:[%s0 + $0x118] sm:$0xff]
  %v56 = vld [vmem:[%s0 + $0x120] sm:$0xff]
  %v57 = vld [vmem:[%s0 + $0x128] sm:$0xff]
  %v58 = vld [vmem:[%s0 + $0x130] sm:$0xff]
  %v59 = vld [vmem:[%s0 + $0x138] sm:$0xff]
  %v60 = vld [vmem:[%s0 + $0x140] sm:$0xff]
  %v61 = vld [vmem:[%s0 + $0x148] sm:$0xff]
  %v62 = vld [vmem:[%s0 + $0x150] sm:$0xff]
  %v63 = vld [vmem:[%s0 + $0x158] sm:$0xff]
  %v64 = vld [vmem:[%s0 + $0x160] sm:$0xff]
  %v65 = vld [vmem:[%s0 + $0x168] sm:$0xff]
  %v66 = vld [vmem:[%s0 + $0x170] sm:$0xff]
  %v67 = vld [vmem:[%s0 + $0x178] sm:$0xff]
  %v68 = vld [vmem:[%s0 + $0x180] sm:$0xff]
  %v69 = vld [vmem:[%s0 + $0x188] sm:$0xff]
  %v70 = vld [vmem:[%s0 + $0x190] sm:$0xff]
  %v71 = vld [vmem:[%s0 + $0x198] sm:$0xff]
  %v72 = vld [vmem:[%s0 + $0x1a0] sm:$0xff]
  %v73 = vld [vmem:[%s0 + $0x1a8] sm:$0xff]
  %v74 = vld [vmem:[%s0 + $0x1b0] sm:$0xff]
  %v75 = vld [vmem:[%s0 + $0x1b8] sm:$0xff]
  %v76 = vld [vmem:[%s0 + $0x1c0] sm:$0xff]
  %v77 = vld [vmem:[%s0 + $0x1c8] sm:$0xff]
  %v78 = vld [vmem:[%s0 + $0x1d0] sm:$0xff]
  %v79 = vld [vmem:[%s0 + $0x1d8] sm:$0xff]
  %v80 = vld [vmem:[%s0 + $0x1e0] sm:$0xff]
  %v81 = vld [vmem:[%s0 + $0x1e8] sm:$0xff]
  %v82 = vld [vmem:[%s0 + $0x1f0] sm:$0xff]
  %v83 = vld [vmem:[%s0 + $0x1f8] sm:$0xff]
  %v84 = vld [vmem:[%s1] sm:$0x1]
  %v85 = vld [vmem:[%s2] sm:$0x1]
  %vm86 = vcmask 31744
  %v87 = vsel %vm86, %v20, 0.0
  %88 = vadd.xlane.f32.xlu0 %v87
  %v89 = vpop.xlane.xlu0 %88
  %v90 = vsel %vm86, %v21, 0.0
  %91 = vadd.xlane.f32.xlu0 %v90
  %v92 = vpop.xlane.xlu0 %91
  %v93 = vsel %vm86, %v22, 0.0
  %94 = vadd.xlane.f32.xlu0 %v93
  %v95 = vpop.xlane.xlu0 %94
  %v96 = vsel %vm86, %v23, 0.0
  %97 = vadd.xlane.f32.xlu0 %v96
  %v98 = vpop.xlane.xlu0 %97
  %v99 = vsel %vm86, %v24, 0.0
  %100 = vadd.xlane.f32.xlu0 %v99
  %v101 = vpop.xlane.xlu0 %100
  %v102 = vsel %vm86, %v25, 0.0
  %103 = vadd.xlane.f32.xlu0 %v102
  %v104 = vpop.xlane.xlu0 %103
  %v105 = vsel %vm86, %v26, 0.0
  %106 = vadd.xlane.f32.xlu0 %v105
  %v107 = vpop.xlane.xlu0 %106
  %v108 = vsel %vm86, %v27, 0.0
  %109 = vadd.xlane.f32.xlu0 %v108
  %v110 = vpop.xlane.xlu0 %109
  %v111 = vsel %vm86, %v28, 0.0
  %112 = vadd.xlane.f32.xlu0 %v111
  %v113 = vpop.xlane.xlu0 %112
  %v114 = vsel %vm86, %v29, 0.0
  %115 = vadd.xlane.f32.xlu0 %v114
  %v116 = vpop.xlane.xlu0 %115
  %v117 = vsel %vm86, %v30, 0.0
  %118 = vadd.xlane.f32.xlu0 %v117
  %v119 = vpop.xlane.xlu0 %118
  %v120 = vsel %vm86, %v31, 0.0
  %121 = vadd.xlane.f32.xlu0 %v120
  %v122 = vpop.xlane.xlu0 %121
  %v123 = vsel %vm86, %v32, 0.0
  %124 = vadd.xlane.f32.xlu0 %v123
  %v125 = vpop.xlane.xlu0 %124
  %v126 = vsel %vm86, %v33, 0.0
  %127 = vadd.xlane.f32.xlu0 %v126
  %v128 = vpop.xlane.xlu0 %127
  %v129 = vsel %vm86, %v34, 0.0
  %130 = vadd.xlane.f32.xlu0 %v129
  %v131 = vpop.xlane.xlu0 %130
  %v132 = vsel %vm86, %v35, 0.0
  %133 = vadd.xlane.f32.xlu0 %v132
  %v134 = vpop.xlane.xlu0 %133
  %v135 = vsel %vm86, %v36, 0.0
  %136 = vadd.xlane.f32.xlu0 %v135
  %v137 = vpop.xlane.xlu0 %136
  %v138 = vsel %vm86, %v37, 0.0
  %139 = vadd.xlane.f32.xlu0 %v138
  %v140 = vpop.xlane.xlu0 %139
  %v141 = vsel %vm86, %v38, 0.0
  %142 = vadd.xlane.f32.xlu0 %v141
  %v143 = vpop.xlane.xlu0 %142
  %v144 = vsel %vm86, %v39, 0.0
  %145 = vadd.xlane.f32.xlu0 %v144
  %v146 = vpop.xlane.xlu0 %145
  %v147 = vsel %vm86, %v40, 0.0
  %148 = vadd.xlane.f32.xlu0 %v147
  %v149 = vpop.xlane.xlu0 %148
  %v150 = vsel %vm86, %v41, 0.0
  %151 = vadd.xlane.f32.xlu0 %v150
  %v152 = vpop.xlane.xlu0 %151
  %v153 = vsel %vm86, %v42, 0.0
  %154 = vadd.xlane.f32.xlu0 %v153
  %v155 = vpop.xlane.xlu0 %154
  %v156 = vsel %vm86, %v43, 0.0
  %157 = vadd.xlane.f32.xlu0 %v156
  %v158 = vpop.xlane.xlu0 %157
  %v159 = vsel %vm86, %v44, 0.0
  %160 = vadd.xlane.f32.xlu0 %v159
  %v161 = vpop.xlane.xlu0 %160
  %v162 = vsel %vm86, %v45, 0.0
  %163 = vadd.xlane.f32.xlu0 %v162
  %v164 = vpop.xlane.xlu0 %163
  %v165 = vsel %vm86, %v46, 0.0
  %166 = vadd.xlane.f32.xlu0 %v165
  %v167 = vpop.xlane.xlu0 %166
  %v168 = vsel %vm86, %v47, 0.0
  %169 = vadd.xlane.f32.xlu0 %v168
  %v170 = vpop.xlane.xlu0 %169
  %v171 = vsel %vm86, %v48, 0.0
  %172 = vadd.xlane.f32.xlu0 %v171
  %v173 = vpop.xlane.xlu0 %172
  %v174 = vsel %vm86, %v49, 0.0
  %175 = vadd.xlane.f32.xlu0 %v174
  %v176 = vpop.xlane.xlu0 %175
  %v177 = vsel %vm86, %v50, 0.0
  %178 = vadd.xlane.f32.xlu0 %v177
  %v179 = vpop.xlane.xlu0 %178
  %v180 = vsel %vm86, %v51, 0.0
  %181 = vadd.xlane.f32.xlu0 %v180
  %v182 = vpop.xlane.xlu0 %181
  %v183 = vsel %vm86, %v52, 0.0
  %184 = vadd.xlane.f32.xlu0 %v183
  %v185 = vpop.xlane.xlu0 %184
  %v186 = vsel %vm86, %v53, 0.0
  %187 = vadd.xlane.f32.xlu0 %v186
  %v188 = vpop.xlane.xlu0 %187
  %v189 = vsel %vm86, %v54, 0.0
  %190 = vadd.xlane.f32.xlu0 %v189
  %v191 = vpop.xlane.xlu0 %190
  %v192 = vsel %vm86, %v55, 0.0
  %193 = vadd.xlane.f32.xlu0 %v192
  %v194 = vpop.xlane.xlu0 %193
  %v195 = vsel %vm86, %v56, 0.0
  %196 = vadd.xlane.f32.xlu0 %v195
  %v197 = vpop.xlane.xlu0 %196
  %v198 = vsel %vm86, %v57, 0.0
  %199 = vadd.xlane.f32.xlu0 %v198
  %v200 = vpop.xlane.xlu0 %199
  %v201 = vsel %vm86, %v58, 0.0
  %202 = vadd.xlane.f32.xlu0 %v201
  %v203 = vpop.xlane.xlu0 %202
  %v204 = vsel %vm86, %v59, 0.0
  %205 = vadd.xlane.f32.xlu0 %v204
  %v206 = vpop.xlane.xlu0 %205
  %v207 = vsel %vm86, %v60, 0.0
  %208 = vadd.xlane.f32.xlu0 %v207
  %v209 = vpop.xlane.xlu0 %208
  %v210 = vsel %vm86, %v61, 0.0
  %211 = vadd.xlane.f32.xlu0 %v210
  %v212 = vpop.xlane.xlu0 %211
  %v213 = vsel %vm86, %v62, 0.0
  %214 = vadd.xlane.f32.xlu0 %v213
  %v215 = vpop.xlane.xlu0 %214
  %v216 = vsel %vm86, %v63, 0.0
  %217 = vadd.xlane.f32.xlu0 %v216
  %v218 = vpop.xlane.xlu0 %217
  %v219 = vsel %vm86, %v64, 0.0
  %220 = vadd.xlane.f32.xlu0 %v219
  %v221 = vpop.xlane.xlu0 %220
  %v222 = vsel %vm86, %v65, 0.0
  %223 = vadd.xlane.f32.xlu0 %v222
  %v224 = vpop.xlane.xlu0 %223
  %v225 = vsel %vm86, %v66, 0.0
  %226 = vadd.xlane.f32.xlu0 %v225
  %v227 = vpop.xlane.xlu0 %226
  %v228 = vsel %vm86, %v67, 0.0
  %229 = vadd.xlane.f32.xlu0 %v228
  %v230 = vpop.xlane.xlu0 %229
  %v231 = vsel %vm86, %v68, 0.0
  %232 = vadd.xlane.f32.xlu0 %v231
  %v233 = vpop.xlane.xlu0 %232
  %v234 = vsel %vm86, %v69, 0.0
  %235 = vadd.xlane.f32.xlu0 %v234
  %v236 = vpop.xlane.xlu0 %235
  %v237 = vsel %vm86, %v70, 0.0
  %238 = vadd.xlane.f32.xlu0 %v237
  %v239 = vpop.xlane.xlu0 %238
  %v240 = vsel %vm86, %v71, 0.0
  %241 = vadd.xlane.f32.xlu0 %v240
  %v242 = vpop.xlane.xlu0 %241
  %v243 = vsel %vm86, %v72, 0.0
  %244 = vadd.xlane.f32.xlu0 %v243
  %v245 = vpop.xlane.xlu0 %244
  %v246 = vsel %vm86, %v73, 0.0
  %247 = vadd.xlane.f32.xlu0 %v246
  %v248 = vpop.xlane.xlu0 %247
  %v249 = vsel %vm86, %v74, 0.0
  %250 = vadd.xlane.f32.xlu0 %v249
  %v251 = vpop.xlane.xlu0 %250
  %v252 = vsel %vm86, %v75, 0.0
  %253 = vadd.xlane.f32.xlu0 %v252
  %v254 = vpop.xlane.xlu0 %253
  %v255 = vsel %vm86, %v76, 0.0
  %256 = vadd.xlane.f32.xlu0 %v255
  %v257 = vpop.xlane.xlu0 %256
  %v258 = vsel %vm86, %v77, 0.0
  %259 = vadd.xlane.f32.xlu0 %v258
  %v260 = vpop.xlane.xlu0 %259
  %v261 = vsel %vm86, %v78, 0.0
  %262 = vadd.xlane.f32.xlu0 %v261
  %v263 = vpop.xlane.xlu0 %262
  %v264 = vsel %vm86, %v79, 0.0
  %265 = vadd.xlane.f32.xlu0 %v264
  %v266 = vpop.xlane.xlu0 %265
  %v267 = vsel %vm86, %v80, 0.0
  %268 = vadd.xlane.f32.xlu0 %v267
  %v269 = vpop.xlane.xlu0 %268
  %v270 = vsel %vm86, %v81, 0.0
  %271 = vadd.xlane.f32.xlu0 %v270
  %v272 = vpop.xlane.xlu0 %271
  %v273 = vsel %vm86, %v82, 0.0
  %274 = vadd.xlane.f32.xlu0 %v273
  %v275 = vpop.xlane.xlu0 %274
  %v276 = vsel %vm86, %v83, 0.0
  %277 = vadd.xlane.f32.xlu0 %v276
  %v278 = vpop.xlane.xlu0 %277
  %v279 = vrcp.pop 4.0
  %v280 = vmul.f32 %v89, %v279
  %v281 = vmul.f32 %v92, %v279
  %v282 = vmul.f32 %v95, %v279
  %v283 = vmul.f32 %v98, %v279
  %v284 = vmul.f32 %v101, %v279
  %v285 = vmul.f32 %v104, %v279
  %v286 = vmul.f32 %v107, %v279
  %v287 = vmul.f32 %v110, %v279
  %v288 = vmul.f32 %v113, %v279
  %v289 = vmul.f32 %v116, %v279
  %v290 = vmul.f32 %v119, %v279
  %v291 = vmul.f32 %v122, %v279
  %v292 = vmul.f32 %v125, %v279
  %v293 = vmul.f32 %v128, %v279
  %v294 = vmul.f32 %v131, %v279
  %v295 = vmul.f32 %v134, %v279
  %v296 = vmul.f32 %v137, %v279
  %v297 = vmul.f32 %v140, %v279
  %v298 = vmul.f32 %v143, %v279
  %v299 = vmul.f32 %v146, %v279
  %v300 = vmul.f32 %v149, %v279
  %v301 = vmul.f32 %v152, %v279
  %v302 = vmul.f32 %v155, %v279
  %v303 = vmul.f32 %v158, %v279
  %v304 = vmul.f32 %v161, %v279
  %v305 = vmul.f32 %v164, %v279
  %v306 = vmul.f32 %v167, %v279
  %v307 = vmul.f32 %v170, %v279
  %v308 = vmul.f32 %v173, %v279
  %v309 = vmul.f32 %v176, %v279
  %v310 = vmul.f32 %v179, %v279
  %v311 = vmul.f32 %v182, %v279
  %v312 = vmul.f32 %v185, %v279
  %v313 = vmul.f32 %v188, %v279
  %v314 = vmul.f32 %v191, %v279
  %v315 = vmul.f32 %v194, %v279
  %v316 = vmul.f32 %v197, %v279
  %v317 = vmul.f32 %v200, %v279
  %v318 = vmul.f32 %v203, %v279
  %v319 = vmul.f32 %v206, %v279
  %v320 = vmul.f32 %v209, %v279
  %v321 = vmul.f32 %v212, %v279
  %v322 = vmul.f32 %v215, %v279
  %v323 = vmul.f32 %v218, %v279
  %v324 = vmul.f32 %v221, %v279
  %v325 = vmul.f32 %v224, %v279
  %v326 = vmul.f32 %v227, %v279
  %v327 = vmul.f32 %v230, %v279
  %v328 = vmul.f32 %v233, %v279
  %v329 = vmul.f32 %v236, %v279
  %v330 = vmul.f32 %v239, %v279
  %v331 = vmul.f32 %v242, %v279
  %v332 = vmul.f32 %v245, %v279
  %v333 = vmul.f32 %v248, %v279
  %v334 = vmul.f32 %v251, %v279
  %v335 = vmul.f32 %v254, %v279
  %v336 = vmul.f32 %v257, %v279
  %v337 = vmul.f32 %v260, %v279
  %v338 = vmul.f32 %v263, %v279
  %v339 = vmul.f32 %v266, %v279
  %v340 = vmul.f32 %v269, %v279
  %v341 = vmul.f32 %v272, %v279
  %v342 = vmul.f32 %v275, %v279
  %v343 = vmul.f32 %v278, %v279
  %v344 = vsub.f32 %v20, %v280
  %v345 = vsub.f32 %v21, %v281
  %v346 = vsub.f32 %v22, %v282
  %v347 = vsub.f32 %v23, %v283
  %v348 = vsub.f32 %v24, %v284
  %v349 = vsub.f32 %v25, %v285
  %v350 = vsub.f32 %v26, %v286
  %v351 = vsub.f32 %v27, %v287
  %v352 = vsub.f32 %v28, %v288
  %v353 = vsub.f32 %v29, %v289
  %v354 = vsub.f32 %v30, %v290
  %v355 = vsub.f32 %v31, %v291
  %v356 = vsub.f32 %v32, %v292
  %v357 = vsub.f32 %v33, %v293
  %v358 = vsub.f32 %v34, %v294
  %v359 = vsub.f32 %v35, %v295
  %v360 = vsub.f32 %v36, %v296
  %v361 = vsub.f32 %v37, %v297
  %v362 = vsub.f32 %v38, %v298
  %v363 = vsub.f32 %v39, %v299
  %v364 = vsub.f32 %v40, %v300
  %v365 = vsub.f32 %v41, %v301
  %v366 = vsub.f32 %v42, %v302
  %v367 = vsub.f32 %v43, %v303
  %v368 = vsub.f32 %v44, %v304
  %v369 = vsub.f32 %v45, %v305
  %v370 = vsub.f32 %v46, %v306
  %v371 = vsub.f32 %v47, %v307
  %v372 = vsub.f32 %v48, %v308
  %v373 = vsub.f32 %v49, %v309
  %v374 = vsub.f32 %v50, %v310
  %v375 = vsub.f32 %v51, %v311
  %v376 = vsub.f32 %v52, %v312
  %v377 = vsub.f32 %v53, %v313
  %v378 = vsub.f32 %v54, %v314
  %v379 = vsub.f32 %v55, %v315
  %v380 = vsub.f32 %v56, %v316
  %v381 = vsub.f32 %v57, %v317
  %v382 = vsub.f32 %v58, %v318
  %v383 = vsub.f32 %v59, %v319
  %v384 = vsub.f32 %v60, %v320
  %v385 = vsub.f32 %v61, %v321
  %v386 = vsub.f32 %v62, %v322
  %v387 = vsub.f32 %v63, %v323
  %v388 = vsub.f32 %v64, %v324
  %v389 = vsub.f32 %v65, %v325
  %v390 = vsub.f32 %v66, %v326
  %v391 = vsub.f32 %v67, %v327
  %v392 = vsub.f32 %v68, %v328
  %v393 = vsub.f32 %v69, %v329
  %v394 = vsub.f32 %v70, %v330
  %v395 = vsub.f32 %v71, %v331
  %v396 = vsub.f32 %v72, %v332
  %v397 = vsub.f32 %v73, %v333
  %v398 = vsub.f32 %v74, %v334
  %v399 = vsub.f32 %v75, %v335
  %v400 = vsub.f32 %v76, %v336
  %v401 = vsub.f32 %v77, %v337
  %v402 = vsub.f32 %v78, %v338
  %v403 = vsub.f32 %v79, %v339
  %v404 = vsub.f32 %v80, %v340
  %v405 = vsub.f32 %v81, %v341
  %v406 = vsub.f32 %v82, %v342
  %v407 = vsub.f32 %v83, %v343
  %v408 = vmul.f32 %v344, %v344
  %v409 = vmul.f32 %v345, %v345
  %v410 = vmul.f32 %v346, %v346
  %v411 = vmul.f32 %v347, %v347
  %v412 = vmul.f32 %v348, %v348
  %v413 = vmul.f32 %v349, %v349
  %v414 = vmul.f32 %v350, %v350
  %v415 = vmul.f32 %v351, %v351
  %v416 = vmul.f32 %v352, %v352
  %v417 = vmul.f32 %v353, %v353
  %v418 = vmul.f32 %v354, %v354
  %v419 = vmul.f32 %v355, %v355
  %v420 = vmul.f32 %v356, %v356
  %v421 = vmul.f32 %v357, %v357
  %v422 = vmul.f32 %v358, %v358
  %v423 = vmul.f32 %v359, %v359
  %v424 = vmul.f32 %v360, %v360
  %v425 = vmul.f32 %v361, %v361
  %v426 = vmul.f32 %v362, %v362
  %v427 = vmul.f32 %v363, %v363
  %v428 = vmul.f32 %v364, %v364
  %v429 = vmul.f32 %v365, %v365
  %v430 = vmul.f32 %v366, %v366
  %v431 = vmul.f32 %v367, %v367
  %v432 = vmul.f32 %v368, %v368
  %v433 = vmul.f32 %v369, %v369
  %v434 = vmul.f32 %v370, %v370
  %v435 = vmul.f32 %v371, %v371
  %v436 = vmul.f32 %v372, %v372
  %v437 = vmul.f32 %v373, %v373
  %v438 = vmul.f32 %v374, %v374
  %v439 = vmul.f32 %v375, %v375
  %v440 = vmul.f32 %v376, %v376
  %v441 = vmul.f32 %v377, %v377
  %v442 = vmul.f32 %v378, %v378
  %v443 = vmul.f32 %v379, %v379
  %v444 = vmul.f32 %v380, %v380
  %v445 = vmul.f32 %v381, %v381
  %v446 = vmul.f32 %v382, %v382
  %v447 = vmul.f32 %v383, %v383
  %v448 = vmul.f32 %v384, %v384
  %v449 = vmul.f32 %v385, %v385
  %v450 = vmul.f32 %v386, %v386
  %v451 = vmul.f32 %v387, %v387
  %v452 = vmul.f32 %v388, %v388
  %v453 = vmul.f32 %v389, %v389
  %v454 = vmul.f32 %v390, %v390
  %v455 = vmul.f32 %v391, %v391
  %v456 = vmul.f32 %v392, %v392
  %v457 = vmul.f32 %v393, %v393
  %v458 = vmul.f32 %v394, %v394
  %v459 = vmul.f32 %v395, %v395
  %v460 = vmul.f32 %v396, %v396
  %v461 = vmul.f32 %v397, %v397
  %v462 = vmul.f32 %v398, %v398
  %v463 = vmul.f32 %v399, %v399
  %v464 = vmul.f32 %v400, %v400
  %v465 = vmul.f32 %v401, %v401
  %v466 = vmul.f32 %v402, %v402
  %v467 = vmul.f32 %v403, %v403
  %v468 = vmul.f32 %v404, %v404
  %v469 = vmul.f32 %v405, %v405
  %v470 = vmul.f32 %v406, %v406
  %v471 = vmul.f32 %v407, %v407
  %v472 = vsel %vm86, %v408, 0.0
  %473 = vadd.xlane.f32.xlu0 %v472
  %v474 = vpop.xlane.xlu0 %473
  %v475 = vsel %vm86, %v409, 0.0
  %476 = vadd.xlane.f32.xlu0 %v475
  %v477 = vpop.xlane.xlu0 %476
  %v478 = vsel %vm86, %v410, 0.0
  %479 = vadd.xlane.f32.xlu0 %v478
  %v480 = vpop.xlane.xlu0 %479
  %v481 = vsel %vm86, %v411, 0.0
  %482 = vadd.xlane.f32.xlu0 %v481
  %v483 = vpop.xlane.xlu0 %482
  %v484 = vsel %vm86, %v412, 0.0
  %485 = vadd.xlane.f32.xlu0 %v484
  %v486 = vpop.xlane.xlu0 %485
  %v487 = vsel %vm86, %v413, 0.0
  %488 = vadd.xlane.f32.xlu0 %v487
  %v489 = vpop.xlane.xlu0 %488
  %v490 = vsel %vm86, %v414, 0.0
  %491 = vadd.xlane.f32.xlu0 %v490
  %v492 = vpop.xlane.xlu0 %491
  %v493 = vsel %vm86, %v415, 0.0
  %494 = vadd.xlane.f32.xlu0 %v493
  %v495 = vpop.xlane.xlu0 %494
  %v496 = vsel %vm86, %v416, 0.0
  %497 = vadd.xlane.f32.xlu0 %v496
  %v498 = vpop.xlane.xlu0 %497
  %v499 = vsel %vm86, %v417, 0.0
  %500 = vadd.xlane.f32.xlu0 %v499
  %v501 = vpop.xlane.xlu0 %500
  %v502 = vsel %vm86, %v418, 0.0
  %503 = vadd.xlane.f32.xlu0 %v502
  %v504 = vpop.xlane.xlu0 %503
  %v505 = vsel %vm86, %v419, 0.0
  %506 = vadd.xlane.f32.xlu0 %v505
  %v507 = vpop.xlane.xlu0 %506
  %v508 = vsel %vm86, %v420, 0.0
  %509 = vadd.xlane.f32.xlu0 %v508
  %v510 = vpop.xlane.xlu0 %509
  %v511 = vsel %vm86, %v421, 0.0
  %512 = vadd.xlane.f32.xlu0 %v511
  %v513 = vpop.xlane.xlu0 %512
  %v514 = vsel %vm86, %v422, 0.0
  %515 = vadd.xlane.f32.xlu0 %v514
  %v516 = vpop.xlane.xlu0 %515
  %v517 = vsel %vm86, %v423, 0.0
  %518 = vadd.xlane.f32.xlu0 %v517
  %v519 = vpop.xlane.xlu0 %518
  %v520 = vsel %vm86, %v424, 0.0
  %521 = vadd.xlane.f32.xlu0 %v520
  %v522 = vpop.xlane.xlu0 %521
  %v523 = vsel %vm86, %v425, 0.0
  %524 = vadd.xlane.f32.xlu0 %v523
  %v525 = vpop.xlane.xlu0 %524
  %v526 = vsel %vm86, %v426, 0.0
  %527 = vadd.xlane.f32.xlu0 %v526
  %v528 = vpop.xlane.xlu0 %527
  %v529 = vsel %vm86, %v427, 0.0
  %530 = vadd.xlane.f32.xlu0 %v529
  %v531 = vpop.xlane.xlu0 %530
  %v532 = vsel %vm86, %v428, 0.0
  %533 = vadd.xlane.f32.xlu0 %v532
  %v534 = vpop.xlane.xlu0 %533
  %v535 = vsel %vm86, %v429, 0.0
  %536 = vadd.xlane.f32.xlu0 %v535
  %v537 = vpop.xlane.xlu0 %536
  %v538 = vsel %vm86, %v430, 0.0
  %539 = vadd.xlane.f32.xlu0 %v538
  %v540 = vpop.xlane.xlu0 %539
  %v541 = vsel %vm86, %v431, 0.0
  %542 = vadd.xlane.f32.xlu0 %v541
  %v543 = vpop.xlane.xlu0 %542
  %v544 = vsel %vm86, %v432, 0.0
  %545 = vadd.xlane.f32.xlu0 %v544
  %v546 = vpop.xlane.xlu0 %545
  %v547 = vsel %vm86, %v433, 0.0
  %548 = vadd.xlane.f32.xlu0 %v547
  %v549 = vpop.xlane.xlu0 %548
  %v550 = vsel %vm86, %v434, 0.0
  %551 = vadd.xlane.f32.xlu0 %v550
  %v552 = vpop.xlane.xlu0 %551
  %v553 = vsel %vm86, %v435, 0.0
  %554 = vadd.xlane.f32.xlu0 %v553
  %v555 = vpop.xlane.xlu0 %554
  %v556 = vsel %vm86, %v436, 0.0
  %557 = vadd.xlane.f32.xlu0 %v556
  %v558 = vpop.xlane.xlu0 %557
  %v559 = vsel %vm86, %v437, 0.0
  %560 = vadd.xlane.f32.xlu0 %v559
  %v561 = vpop.xlane.xlu0 %560
  %v562 = vsel %vm86, %v438, 0.0
  %563 = vadd.xlane.f32.xlu0 %v562
  %v564 = vpop.xlane.xlu0 %563
  %v565 = vsel %vm86, %v439, 0.0
  %566 = vadd.xlane.f32.xlu0 %v565
  %v567 = vpop.xlane.xlu0 %566
  %v568 = vsel %vm86, %v440, 0.0
  %569 = vadd.xlane.f32.xlu0 %v568
  %v570 = vpop.xlane.xlu0 %569
  %v571 = vsel %vm86, %v441, 0.0
  %572 = vadd.xlane.f32.xlu0 %v571
  %v573 = vpop.xlane.xlu0 %572
  %v574 = vsel %vm86, %v442, 0.0
  %575 = vadd.xlane.f32.xlu0 %v574
  %v576 = vpop.xlane.xlu0 %575
  %v577 = vsel %vm86, %v443, 0.0
  %578 = vadd.xlane.f32.xlu0 %v577
  %v579 = vpop.xlane.xlu0 %578
  %v580 = vsel %vm86, %v444, 0.0
  %581 = vadd.xlane.f32.xlu0 %v580
  %v582 = vpop.xlane.xlu0 %581
  %v583 = vsel %vm86, %v445, 0.0
  %584 = vadd.xlane.f32.xlu0 %v583
  %v585 = vpop.xlane.xlu0 %584
  %v586 = vsel %vm86, %v446, 0.0
  %587 = vadd.xlane.f32.xlu0 %v586
  %v588 = vpop.xlane.xlu0 %587
  %v589 = vsel %vm86, %v447, 0.0
  %590 = vadd.xlane.f32.xlu0 %v589
  %v591 = vpop.xlane.xlu0 %590
  %v592 = vsel %vm86, %v448, 0.0
  %593 = vadd.xlane.f32.xlu0 %v592
  %v594 = vpop.xlane.xlu0 %593
  %v595 = vsel %vm86, %v449, 0.0
  %596 = vadd.xlane.f32.xlu0 %v595
  %v597 = vpop.xlane.xlu0 %596
  %v598 = vsel %vm86, %v450, 0.0
  %599 = vadd.xlane.f32.xlu0 %v598
  %v600 = vpop.xlane.xlu0 %599
  %v601 = vsel %vm86, %v451, 0.0
  %602 = vadd.xlane.f32.xlu0 %v601
  %v603 = vpop.xlane.xlu0 %602
  %v604 = vsel %vm86, %v452, 0.0
  %605 = vadd.xlane.f32.xlu0 %v604
  %v606 = vpop.xlane.xlu0 %605
  %v607 = vsel %vm86, %v453, 0.0
  %608 = vadd.xlane.f32.xlu0 %v607
  %v609 = vpop.xlane.xlu0 %608
  %v610 = vsel %vm86, %v454, 0.0
  %611 = vadd.xlane.f32.xlu0 %v610
  %v612 = vpop.xlane.xlu0 %611
  %v613 = vsel %vm86, %v455, 0.0
  %614 = vadd.xlane.f32.xlu0 %v613
  %v615 = vpop.xlane.xlu0 %614
  %v616 = vsel %vm86, %v456, 0.0
  %617 = vadd.xlane.f32.xlu0 %v616
  %v618 = vpop.xlane.xlu0 %617
  %v619 = vsel %vm86, %v457, 0.0
  %620 = vadd.xlane.f32.xlu0 %v619
  %v621 = vpop.xlane.xlu0 %620
  %v622 = vsel %vm86, %v458, 0.0
  %623 = vadd.xlane.f32.xlu0 %v622
  %v624 = vpop.xlane.xlu0 %623
  %v625 = vsel %vm86, %v459, 0.0
  %626 = vadd.xlane.f32.xlu0 %v625
  %v627 = vpop.xlane.xlu0 %626
  %v628 = vsel %vm86, %v460, 0.0
  %629 = vadd.xlane.f32.xlu0 %v628
  %v630 = vpop.xlane.xlu0 %629
  %v631 = vsel %vm86, %v461, 0.0
  %632 = vadd.xlane.f32.xlu0 %v631
  %v633 = vpop.xlane.xlu0 %632
  %v634 = vsel %vm86, %v462, 0.0
  %635 = vadd.xlane.f32.xlu0 %v634
  %v636 = vpop.xlane.xlu0 %635
  %v637 = vsel %vm86, %v463, 0.0
  %638 = vadd.xlane.f32.xlu0 %v637
  %v639 = vpop.xlane.xlu0 %638
  %v640 = vsel %vm86, %v464, 0.0
  %641 = vadd.xlane.f32.xlu0 %v640
  %v642 = vpop.xlane.xlu0 %641
  %v643 = vsel %vm86, %v465, 0.0
  %644 = vadd.xlane.f32.xlu0 %v643
  %v645 = vpop.xlane.xlu0 %644
  %v646 = vsel %vm86, %v466, 0.0
  %647 = vadd.xlane.f32.xlu0 %v646
  %v648 = vpop.xlane.xlu0 %647
  %v649 = vsel %vm86, %v467, 0.0
  %650 = vadd.xlane.f32.xlu0 %v649
  %v651 = vpop.xlane.xlu0 %650
  %v652 = vsel %vm86, %v468, 0.0
  %653 = vadd.xlane.f32.xlu0 %v652
  %v654 = vpop.xlane.xlu0 %653
  %v655 = vsel %vm86, %v469, 0.0
  %656 = vadd.xlane.f32.xlu0 %v655
  %v657 = vpop.xlane.xlu0 %656
  %v658 = vsel %vm86, %v470, 0.0
  %659 = vadd.xlane.f32.xlu0 %v658
  %v660 = vpop.xlane.xlu0 %659
  %v661 = vsel %vm86, %v471, 0.0
  %662 = vadd.xlane.f32.xlu0 %v661
  %v663 = vpop.xlane.xlu0 %662
  %v664 = vmul.f32 %v474, %v279
  %v665 = vmul.f32 %v477, %v279
  %v666 = vmul.f32 %v480, %v279
  %v667 = vmul.f32 %v483, %v279
  %v668 = vmul.f32 %v486, %v279
  %v669 = vmul.f32 %v489, %v279
  %v670 = vmul.f32 %v492, %v279
  %v671 = vmul.f32 %v495, %v279
  %v672 = vmul.f32 %v498, %v279
  %v673 = vmul.f32 %v501, %v279
  %v674 = vmul.f32 %v504, %v279
  %v675 = vmul.f32 %v507, %v279
  %v676 = vmul.f32 %v510, %v279
  %v677 = vmul.f32 %v513, %v279
  %v678 = vmul.f32 %v516, %v279
  %v679 = vmul.f32 %v519, %v279
  %v680 = vmul.f32 %v522, %v279
  %v681 = vmul.f32 %v525, %v279
  %v682 = vmul.f32 %v528, %v279
  %v683 = vmul.f32 %v531, %v279
  %v684 = vmul.f32 %v534, %v279
  %v685 = vmul.f32 %v537, %v279
  %v686 = vmul.f32 %v540, %v279
  %v687 = vmul.f32 %v543, %v279
  %v688 = vmul.f32 %v546, %v279
  %v689 = vmul.f32 %v549, %v279
  %v690 = vmul.f32 %v552, %v279
  %v691 = vmul.f32 %v555, %v279
  %v692 = vmul.f32 %v558, %v279
  %v693 = vmul.f32 %v561, %v279
  %v694 = vmul.f32 %v564, %v279
  %v695 = vmul.f32 %v567, %v279
  %v696 = vmul.f32 %v570, %v279
  %v697 = vmul.f32 %v573, %v279
  %v698 = vmul.f32 %v576, %v279
  %v699 = vmul.f32 %v579, %v279
  %v700 = vmul.f32 %v582, %v279
  %v701 = vmul.f32 %v585, %v279
  %v702 = vmul.f32 %v588, %v279
  %v703 = vmul.f32 %v591, %v279
  %v704 = vmul.f32 %v594, %v279
  %v705 = vmul.f32 %v597, %v279
  %v706 = vmul.f32 %v600, %v279
  %v707 = vmul.f32 %v603, %v279
  %v708 = vmul.f32 %v606, %v279
  %v709 = vmul.f32 %v609, %v279
  %v710 = vmul.f32 %v612, %v279
  %v711 = vmul.f32 %v615, %v279
  %v712 = vmul.f32 %v618, %v279
  %v713 = vmul.f32 %v621, %v279
  %v714 = vmul.f32 %v624, %v279
  %v715 = vmul.f32 %v627, %v279
  %v716 = vmul.f32 %v630, %v279
  %v717 = vmul.f32 %v633, %v279
  %v718 = vmul.f32 %v636, %v279
  %v719 = vmul.f32 %v639, %v279
  %v720 = vmul.f32 %v642, %v279
  %v721 = vmul.f32 %v645, %v279
  %v722 = vmul.f32 %v648, %v279
  %v723 = vmul.f32 %v651, %v279
  %v724 = vmul.f32 %v654, %v279
  %v725 = vmul.f32 %v657, %v279
  %v726 = vmul.f32 %v660, %v279
  %v727 = vmul.f32 %v663, %v279
  %v728 = vadd.f32 %v664, 1e-06
  %v729 = vadd.f32 %v665, 1e-06
  %v730 = vadd.f32 %v666, 1e-06
  %v731 = vadd.f32 %v667, 1e-06
  %v732 = vadd.f32 %v668, 1e-06
  %v733 = vadd.f32 %v669, 1e-06
  %v734 = vadd.f32 %v670, 1e-06
  %v735 = vadd.f32 %v671, 1e-06
  %v736 = vadd.f32 %v672, 1e-06
  %v737 = vadd.f32 %v673, 1e-06
  %v738 = vadd.f32 %v674, 1e-06
  %v739 = vadd.f32 %v675, 1e-06
  %v740 = vadd.f32 %v676, 1e-06
  %v741 = vadd.f32 %v677, 1e-06
  %v742 = vadd.f32 %v678, 1e-06
  %v743 = vadd.f32 %v679, 1e-06
  %v744 = vadd.f32 %v680, 1e-06
  %v745 = vadd.f32 %v681, 1e-06
  %v746 = vadd.f32 %v682, 1e-06
  %v747 = vadd.f32 %v683, 1e-06
  %v748 = vadd.f32 %v684, 1e-06
  %v749 = vadd.f32 %v685, 1e-06
  %v750 = vadd.f32 %v686, 1e-06
  %v751 = vadd.f32 %v687, 1e-06
  %v752 = vadd.f32 %v688, 1e-06
  %v753 = vadd.f32 %v689, 1e-06
  %v754 = vadd.f32 %v690, 1e-06
  %v755 = vadd.f32 %v691, 1e-06
  %v756 = vadd.f32 %v692, 1e-06
  %v757 = vadd.f32 %v693, 1e-06
  %v758 = vadd.f32 %v694, 1e-06
  %v759 = vadd.f32 %v695, 1e-06
  %v760 = vadd.f32 %v696, 1e-06
  %v761 = vadd.f32 %v697, 1e-06
  %v762 = vadd.f32 %v698, 1e-06
  %v763 = vadd.f32 %v699, 1e-06
  %v764 = vadd.f32 %v700, 1e-06
  %v765 = vadd.f32 %v701, 1e-06
  %v766 = vadd.f32 %v702, 1e-06
  %v767 = vadd.f32 %v703, 1e-06
  %v768 = vadd.f32 %v704, 1e-06
  %v769 = vadd.f32 %v705, 1e-06
  %v770 = vadd.f32 %v706, 1e-06
  %v771 = vadd.f32 %v707, 1e-06
  %v772 = vadd.f32 %v708, 1e-06
  %v773 = vadd.f32 %v709, 1e-06
  %v774 = vadd.f32 %v710, 1e-06
  %v775 = vadd.f32 %v711, 1e-06
  %v776 = vadd.f32 %v712, 1e-06
  %v777 = vadd.f32 %v713, 1e-06
  %v778 = vadd.f32 %v714, 1e-06
  %v779 = vadd.f32 %v715, 1e-06
  %v780 = vadd.f32 %v716, 1e-06
  %v781 = vadd.f32 %v717, 1e-06
  %v782 = vadd.f32 %v718, 1e-06
  %v783 = vadd.f32 %v719, 1e-06
  %v784 = vadd.f32 %v720, 1e-06
  %v785 = vadd.f32 %v721, 1e-06
  %v786 = vadd.f32 %v722, 1e-06
  %v787 = vadd.f32 %v723, 1e-06
  %v788 = vadd.f32 %v724, 1e-06
  %v789 = vadd.f32 %v725, 1e-06
  %v790 = vadd.f32 %v726, 1e-06
  %v791 = vadd.f32 %v727, 1e-06
  %v792 = vrsqrt.pop %v728
  %v793 = vrsqrt.pop %v729
  %v794 = vrsqrt.pop %v730
  %v795 = vrsqrt.pop %v731
  %v796 = vrsqrt.pop %v732
  %v797 = vrsqrt.pop %v733
  %v798 = vrsqrt.pop %v734
  %v799 = vrsqrt.pop %v735
  %v800 = vrsqrt.pop %v736
  %v801 = vrsqrt.pop %v737
  %v802 = vrsqrt.pop %v738
  %v803 = vrsqrt.pop %v739
  %v804 = vrsqrt.pop %v740
  %v805 = vrsqrt.pop %v741
  %v806 = vrsqrt.pop %v742
  %v807 = vrsqrt.pop %v743
  %v808 = vrsqrt.pop %v744
  %v809 = vrsqrt.pop %v745
  %v810 = vrsqrt.pop %v746
  %v811 = vrsqrt.pop %v747
  %v812 = vrsqrt.pop %v748
  %v813 = vrsqrt.pop %v749
  %v814 = vrsqrt.pop %v750
  %v815 = vrsqrt.pop %v751
  %v816 = vrsqrt.pop %v752
  %v817 = vrsqrt.pop %v753
  %v818 = vrsqrt.pop %v754
  %v819 = vrsqrt.pop %v755
  %v820 = vrsqrt.pop %v756
  %v821 = vrsqrt.pop %v757
  %v822 = vrsqrt.pop %v758
  %v823 = vrsqrt.pop %v759
  %v824 = vrsqrt.pop %v760
  %v825 = vrsqrt.pop %v761
  %v826 = vrsqrt.pop %v762
  %v827 = vrsqrt.pop %v763
  %v828 = vrsqrt.pop %v764
  %v829 = vrsqrt.pop %v765
  %v830 = vrsqrt.pop %v766
  %v831 = vrsqrt.pop %v767
  %v832 = vrsqrt.pop %v768
  %v833 = vrsqrt.pop %v769
  %v834 = vrsqrt.pop %v770
  %v835 = vrsqrt.pop %v771
  %v836 = vrsqrt.pop %v772
  %v837 = vrsqrt.pop %v773
  %v838 = vrsqrt.pop %v774
  %v839 = vrsqrt.pop %v775
  %v840 = vrsqrt.pop %v776
  %v841 = vrsqrt.pop %v777
  %v842 = vrsqrt.pop %v778
  %v843 = vrsqrt.pop %v779
  %v844 = vrsqrt.pop %v780
  %v845 = vrsqrt.pop %v781
  %v846 = vrsqrt.pop %v782
  %v847 = vrsqrt.pop %v783
  %v848 = vrsqrt.pop %v784
  %v849 = vrsqrt.pop %v785
  %v850 = vrsqrt.pop %v786
  %v851 = vrsqrt.pop %v787
  %v852 = vrsqrt.pop %v788
  %v853 = vrsqrt.pop %v789
  %v854 = vrsqrt.pop %v790
  %v855 = vrsqrt.pop %v791
  %v856 = vmul.f32 %v344, %v792
  %v857 = vmul.f32 %v345, %v793
  %v858 = vmul.f32 %v346, %v794
  %v859 = vmul.f32 %v347, %v795
  %v860 = vmul.f32 %v348, %v796
  %v861 = vmul.f32 %v349, %v797
  %v862 = vmul.f32 %v350, %v798
  %v863 = vmul.f32 %v351, %v799
  %v864 = vmul.f32 %v352, %v800
  %v865 = vmul.f32 %v353, %v801
  %v866 = vmul.f32 %v354, %v802
  %v867 = vmul.f32 %v355, %v803
  %v868 = vmul.f32 %v356, %v804
  %v869 = vmul.f32 %v357, %v805
  %v870 = vmul.f32 %v358, %v806
  %v871 = vmul.f32 %v359, %v807
  %v872 = vmul.f32 %v360, %v808
  %v873 = vmul.f32 %v361, %v809
  %v874 = vmul.f32 %v362, %v810
  %v875 = vmul.f32 %v363, %v811
  %v876 = vmul.f32 %v364, %v812
  %v877 = vmul.f32 %v365, %v813
  %v878 = vmul.f32 %v366, %v814
  %v879 = vmul.f32 %v367, %v815
  %v880 = vmul.f32 %v368, %v816
  %v881 = vmul.f32 %v369, %v817
  %v882 = vmul.f32 %v370, %v818
  %v883 = vmul.f32 %v371, %v819
  %v884 = vmul.f32 %v372, %v820
  %v885 = vmul.f32 %v373, %v821
  %v886 = vmul.f32 %v374, %v822
  %v887 = vmul.f32 %v375, %v823
  %v888 = vmul.f32 %v376, %v824
  %v889 = vmul.f32 %v377, %v825
  %v890 = vmul.f32 %v378, %v826
  %v891 = vmul.f32 %v379, %v827
  %v892 = vmul.f32 %v380, %v828
  %v893 = vmul.f32 %v381, %v829
  %v894 = vmul.f32 %v382, %v830
  %v895 = vmul.f32 %v383, %v831
  %v896 = vmul.f32 %v384, %v832
  %v897 = vmul.f32 %v385, %v833
  %v898 = vmul.f32 %v386, %v834
  %v899 = vmul.f32 %v387, %v835
  %v900 = vmul.f32 %v388, %v836
  %v901 = vmul.f32 %v389, %v837
  %v902 = vmul.f32 %v390, %v838
  %v903 = vmul.f32 %v391, %v839
  %v904 = vmul.f32 %v392, %v840
  %v905 = vmul.f32 %v393, %v841
  %v906 = vmul.f32 %v394, %v842
  %v907 = vmul.f32 %v395, %v843
  %v908 = vmul.f32 %v396, %v844
  %v909 = vmul.f32 %v397, %v845
  %v910 = vmul.f32 %v398, %v846
  %v911 = vmul.f32 %v399, %v847
  %v912 = vmul.f32 %v400, %v848
  %v913 = vmul.f32 %v401, %v849
  %v914 = vmul.f32 %v402, %v850
  %v915 = vmul.f32 %v403, %v851
  %v916 = vmul.f32 %v404, %v852
  %v917 = vmul.f32 %v405, %v853
  %v918 = vmul.f32 %v406, %v854
  %v919 = vmul.f32 %v407, %v855
  %v921 = vlaneseq
  %v922 = vshrl.u32 %v921, 7
  %v923 = vsub.s32 0, %v922
  %v924 = vrot.slane %v84, %v923
  %v926 = vmul.f32 %v856, %v924
  %v927 = vmul.f32 %v857, %v924
  %v928 = vmul.f32 %v858, %v924
  %v929 = vmul.f32 %v859, %v924
  %v930 = vmul.f32 %v860, %v924
  %v931 = vmul.f32 %v861, %v924
  %v932 = vmul.f32 %v862, %v924
  %v933 = vmul.f32 %v863, %v924
  %v934 = vmul.f32 %v864, %v924
  %v935 = vmul.f32 %v865, %v924
  %v936 = vmul.f32 %v866, %v924
  %v937 = vmul.f32 %v867, %v924
  %v938 = vmul.f32 %v868, %v924
  %v939 = vmul.f32 %v869, %v924
  %v940 = vmul.f32 %v870, %v924
  %v941 = vmul.f32 %v871, %v924
  %v942 = vmul.f32 %v872, %v924
  %v943 = vmul.f32 %v873, %v924
  %v944 = vmul.f32 %v874, %v924
  %v945 = vmul.f32 %v875, %v924
  %v946 = vmul.f32 %v876, %v924
  %v947 = vmul.f32 %v877, %v924
  %v948 = vmul.f32 %v878, %v924
  %v949 = vmul.f32 %v879, %v924
  %v950 = vmul.f32 %v880, %v924
  %v951 = vmul.f32 %v881, %v924
  %v952 = vmul.f32 %v882, %v924
  %v953 = vmul.f32 %v883, %v924
  %v954 = vmul.f32 %v884, %v924
  %v955 = vmul.f32 %v885, %v924
  %v956 = vmul.f32 %v886, %v924
  %v957 = vmul.f32 %v887, %v924
  %v958 = vmul.f32 %v888, %v924
  %v959 = vmul.f32 %v889, %v924
  %v960 = vmul.f32 %v890, %v924
  %v961 = vmul.f32 %v891, %v924
  %v962 = vmul.f32 %v892, %v924
  %v963 = vmul.f32 %v893, %v924
  %v964 = vmul.f32 %v894, %v924
  %v965 = vmul.f32 %v895, %v924
  %v966 = vmul.f32 %v896, %v924
  %v967 = vmul.f32 %v897, %v924
  %v968 = vmul.f32 %v898, %v924
  %v969 = vmul.f32 %v899, %v924
  %v970 = vmul.f32 %v900, %v924
  %v971 = vmul.f32 %v901, %v924
  %v972 = vmul.f32 %v902, %v924
  %v973 = vmul.f32 %v903, %v924
  %v974 = vmul.f32 %v904, %v924
  %v975 = vmul.f32 %v905, %v924
  %v976 = vmul.f32 %v906, %v924
  %v977 = vmul.f32 %v907, %v924
  %v978 = vmul.f32 %v908, %v924
  %v979 = vmul.f32 %v909, %v924
  %v980 = vmul.f32 %v910, %v924
  %v981 = vmul.f32 %v911, %v924
  %v982 = vmul.f32 %v912, %v924
  %v983 = vmul.f32 %v913, %v924
  %v984 = vmul.f32 %v914, %v924
  %v985 = vmul.f32 %v915, %v924
  %v986 = vmul.f32 %v916, %v924
  %v987 = vmul.f32 %v917, %v924
  %v988 = vmul.f32 %v918, %v924
  %v989 = vmul.f32 %v919, %v924
  %v991 = vlaneseq
  %v992 = vshrl.u32 %v991, 7
  %v993 = vsub.s32 0, %v992
  %v994 = vrot.slane %v85, %v993
  %v996 = vadd.f32 %v926, %v994
  %v997 = vadd.f32 %v927, %v994
  %v998 = vadd.f32 %v928, %v994
  %v999 = vadd.f32 %v929, %v994
  %v1000 = vadd.f32 %v930, %v994
  %v1001 = vadd.f32 %v931, %v994
  %v1002 = vadd.f32 %v932, %v994
  %v1003 = vadd.f32 %v933, %v994
  %v1004 = vadd.f32 %v934, %v994
  %v1005 = vadd.f32 %v935, %v994
  %v1006 = vadd.f32 %v936, %v994
  %v1007 = vadd.f32 %v937, %v994
  %v1008 = vadd.f32 %v938, %v994
  %v1009 = vadd.f32 %v939, %v994
  %v1010 = vadd.f32 %v940, %v994
  %v1011 = vadd.f32 %v941, %v994
  %v1012 = vadd.f32 %v942, %v994
  %v1013 = vadd.f32 %v943, %v994
  %v1014 = vadd.f32 %v944, %v994
  %v1015 = vadd.f32 %v945, %v994
  %v1016 = vadd.f32 %v946, %v994
  %v1017 = vadd.f32 %v947, %v994
  %v1018 = vadd.f32 %v948, %v994
  %v1019 = vadd.f32 %v949, %v994
  %v1020 = vadd.f32 %v950, %v994
  %v1021 = vadd.f32 %v951, %v994
  %v1022 = vadd.f32 %v952, %v994
  %v1023 = vadd.f32 %v953, %v994
  %v1024 = vadd.f32 %v954, %v994
  %v1025 = vadd.f32 %v955, %v994
  %v1026 = vadd.f32 %v956, %v994
  %v1027 = vadd.f32 %v957, %v994
  %v1028 = vadd.f32 %v958, %v994
  %v1029 = vadd.f32 %v959, %v994
  %v1030 = vadd.f32 %v960, %v994
  %v1031 = vadd.f32 %v961, %v994
  %v1032 = vadd.f32 %v962, %v994
  %v1033 = vadd.f32 %v963, %v994
  %v1034 = vadd.f32 %v964, %v994
  %v1035 = vadd.f32 %v965, %v994
  %v1036 = vadd.f32 %v966, %v994
  %v1037 = vadd.f32 %v967, %v994
  %v1038 = vadd.f32 %v968, %v994
  %v1039 = vadd.f32 %v969, %v994
  %v1040 = vadd.f32 %v970, %v994
  %v1041 = vadd.f32 %v971, %v994
  %v1042 = vadd.f32 %v972, %v994
  %v1043 = vadd.f32 %v973, %v994
  %v1044 = vadd.f32 %v974, %v994
  %v1045 = vadd.f32 %v975, %v994
  %v1046 = vadd.f32 %v976, %v994
  %v1047 = vadd.f32 %v977, %v994
  %v1048 = vadd.f32 %v978, %v994
  %v1049 = vadd.f32 %v979, %v994
  %v1050 = vadd.f32 %v980, %v994
  %v1051 = vadd.f32 %v981, %v994
  %v1052 = vadd.f32 %v982, %v994
  %v1053 = vadd.f32 %v983, %v994
  %v1054 = vadd.f32 %v984, %v994
  %v1055 = vadd.f32 %v985, %v994
  %v1056 = vadd.f32 %v986, %v994
  %v1057 = vadd.f32 %v987, %v994
  %v1058 = vadd.f32 %v988, %v994
  %v1059 = vadd.f32 %v989, %v994
  %v1060 = vpack.c.bf16 %v997, %v996
  %v1061 = vpack.c.bf16 %v999, %v998
  %v1062 = vpack.c.bf16 %v1001, %v1000
  %v1063 = vpack.c.bf16 %v1003, %v1002
  %v1064 = vpack.c.bf16 %v1005, %v1004
  %v1065 = vpack.c.bf16 %v1007, %v1006
  %v1066 = vpack.c.bf16 %v1009, %v1008
  %v1067 = vpack.c.bf16 %v1011, %v1010
  %v1068 = vpack.c.bf16 %v1013, %v1012
  %v1069 = vpack.c.bf16 %v1015, %v1014
  %v1070 = vpack.c.bf16 %v1017, %v1016
  %v1071 = vpack.c.bf16 %v1019, %v1018
  %v1072 = vpack.c.bf16 %v1021, %v1020
  %v1073 = vpack.c.bf16 %v1023, %v1022
  %v1074 = vpack.c.bf16 %v1025, %v1024
  %v1075 = vpack.c.bf16 %v1027, %v1026
  %v1076 = vpack.c.bf16 %v1029, %v1028
  %v1077 = vpack.c.bf16 %v1031, %v1030
  %v1078 = vpack.c.bf16 %v1033, %v1032
  %v1079 = vpack.c.bf16 %v1035, %v1034
  %v1080 = vpack.c.bf16 %v1037, %v1036
  %v1081 = vpack.c.bf16 %v1039, %v1038
  %v1082 = vpack.c.bf16 %v1041, %v1040
  %v1083 = vpack.c.bf16 %v1043, %v1042
  %v1084 = vpack.c.bf16 %v1045, %v1044
  %v1085 = vpack.c.bf16 %v1047, %v1046
  %v1086 = vpack.c.bf16 %v1049, %v1048
  %v1087 = vpack.c.bf16 %v1051, %v1050
  %v1088 = vpack.c.bf16 %v1053, %v1052
  %v1089 = vpack.c.bf16 %v1055, %v1054
  %v1090 = vpack.c.bf16 %v1057, %v1056
  %v1091 = vpack.c.bf16 %v1059, %v1058
  %v1092 = vld [vmem:[%s3] sm:$0x3]
  %v1094 = vsel %vm86, %v1060, 0
  %v1097 = vsel %vm86, %v1061, 0
  %v1100 = vsel %vm86, %v1062, 0
  %v1103 = vsel %vm86, %v1063, 0
  %v1106 = vsel %vm86, %v1064, 0
  %v1109 = vsel %vm86, %v1065, 0
  %v1112 = vsel %vm86, %v1066, 0
  %v1115 = vsel %vm86, %v1067, 0
  %v1118 = vsel %vm86, %v1068, 0
  %v1121 = vsel %vm86, %v1069, 0
  %v1124 = vsel %vm86, %v1070, 0
  %v1127 = vsel %vm86, %v1071, 0
  %v1130 = vsel %vm86, %v1072, 0
  %v1133 = vsel %vm86, %v1073, 0
  %v1136 = vsel %vm86, %v1074, 0
  %v1139 = vsel %vm86, %v1075, 0
  %v1142 = vsel %vm86, %v1076, 0
  %v1145 = vsel %vm86, %v1077, 0
  %v1148 = vsel %vm86, %v1078, 0
  %v1151 = vsel %vm86, %v1079, 0
  %v1154 = vsel %vm86, %v1080, 0
  %v1157 = vsel %vm86, %v1081, 0
  %v1160 = vsel %vm86, %v1082, 0
  %v1163 = vsel %vm86, %v1083, 0
  %v1166 = vsel %vm86, %v1084, 0
  %v1169 = vsel %vm86, %v1085, 0
  %v1172 = vsel %vm86, %v1086, 0
  %v1175 = vsel %vm86, %v1087, 0
  %v1178 = vsel %vm86, %v1088, 0
  %v1181 = vsel %vm86, %v1089, 0
  %v1184 = vsel %vm86, %v1090, 0
  %v1187 = vsel %vm86, %v1091, 0
  %vm1189 = vcmask 1041408
  %v1191 = vsel %vm1189, %v1092, 0
  %1193 = vmatprep.subr.bf16.mxu0 0
  %1194 = vmatpush1.bf16.msra.mxu0 %v1191
  %1195 = vmatprep.subr.bf16.mxu0 0
  %1196 = vmatpush1.bf16.msra.mxu0 0
  %1197 = vmatprep.subr.bf16.mxu0 0
  %1198 = vmatpush1.bf16.msra.mxu0 0
  %1199 = vmatprep.subr.bf16.mxu0 0
  %1200 = vmatpush1.bf16.msra.mxu0 0
  %1201 = vmatprep.subr.bf16.mxu0 0
  %1202 = vmatpush1.bf16.msra.mxu0 0
  %1203 = vmatprep.subr.bf16.mxu0 0
  %1204 = vmatpush1.bf16.msra.mxu0 0
  %1205 = vmatprep.subr.bf16.mxu0 0
  %1206 = vmatpush1.bf16.msra.mxu0 0
  %1207 = vmatprep.subr.bf16.mxu0 0
  %1208 = vmatpush1.bf16.msra.mxu0 0
  %1209 = vmatprep.subr.bf16.mxu0 0
  %1210 = vmatpush1.bf16.msra.mxu0 0
  %1211 = vmatprep.subr.bf16.mxu0 0
  %1212 = vmatpush1.bf16.msra.mxu0 0
  %1213 = vmatprep.subr.bf16.mxu0 0
  %1214 = vmatpush1.bf16.msra.mxu0 0
  %1215 = vmatprep.subr.bf16.mxu0 0
  %1216 = vmatpush1.bf16.msra.mxu0 0
  %1217 = vmatprep.subr.bf16.mxu0 0
  %1218 = vmatpush1.bf16.msra.mxu0 0
  %1219 = vmatprep.subr.bf16.mxu0 0
  %1220 = vmatpush1.bf16.msra.mxu0 0
  %1221 = vmatprep.subr.bf16.mxu0 0
  %1222 = vmatpush1.bf16.msra.mxu0 0
  %1223 = vmatprep.subr.bf16.mxu0 0
  %1224 = vmatpush1.bf16.msra.mxu0 0
  %1225 = vmatprep.mubr.bf16.mxu0 0
  %1226 = vmatmul.mubr.bf16.gmra.mrb[0].mxu0 %v1094
  %v1227 = vpop.f32.mrb[0].mxu0
  %v1228 = vadd.f32 0.0, %v1227
  %v1229 = vpop.f32.mrb[0].mxu0
  %v1230 = vpop.f32.mrb[0].mxu0
  %v1231 = vadd.f32 0.0, %v1230
  %v1232 = vpop.f32.mrb[0].mxu0
  %1233 = vmatprep.mubr.bf16.mxu0 0
  %1234 = vmatmul.mubr.bf16.gmra.mrb[0].mxu0 %v1097
  %v1235 = vpop.f32.mrb[0].mxu0
  %v1236 = vadd.f32 0.0, %v1235
  %v1237 = vpop.f32.mrb[0].mxu0
  %v1238 = vpop.f32.mrb[0].mxu0
  %v1239 = vadd.f32 0.0, %v1238
  %v1240 = vpop.f32.mrb[0].mxu0
  %1241 = vmatprep.mubr.bf16.mxu0 0
  %1242 = vmatmul.mubr.bf16.gmra.mrb[0].mxu0 %v1100
  %v1243 = vpop.f32.mrb[0].mxu0
  %v1244 = vadd.f32 0.0, %v1243
  %v1245 = vpop.f32.mrb[0].mxu0
  %v1246 = vpop.f32.mrb[0].mxu0
  %v1247 = vadd.f32 0.0, %v1246
  %v1248 = vpop.f32.mrb[0].mxu0
  %1249 = vmatprep.mubr.bf16.mxu0 0
  %1250 = vmatmul.mubr.bf16.gmra.mrb[0].mxu0 %v1103
  %v1251 = vpop.f32.mrb[0].mxu0
  %v1252 = vadd.f32 0.0, %v1251
  %v1253 = vpop.f32.mrb[0].mxu0
  %v1254 = vpop.f32.mrb[0].mxu0
  %v1255 = vadd.f32 0.0, %v1254
  %v1256 = vpop.f32.mrb[0].mxu0
  %1257 = vmatprep.mubr.bf16.mxu0 0
  %1258 = vmatmul.mubr.bf16.gmra.mrb[0].mxu0 %v1106
  %v1259 = vpop.f32.mrb[0].mxu0
  %v1260 = vadd.f32 0.0, %v1259
  %v1261 = vpop.f32.mrb[0].mxu0
  %v1262 = vpop.f32.mrb[0].mxu0
  %v1263 = vadd.f32 0.0, %v1262
  %v1264 = vpop.f32.mrb[0].mxu0
  %1265 = vmatprep.mubr.bf16.mxu0 0
  %1266 = vmatmul.mubr.bf16.gmra.mrb[0].mxu0 %v1109
  %v1267 = vpop.f32.mrb[0].mxu0
  %v1268 = vadd.f32 0.0, %v1267
  %v1269 = vpop.f32.mrb[0].mxu0
  %v1270 = vpop.f32.mrb[0].mxu0
  %v1271 = vadd.f32 0.0, %v1270
  %v1272 = vpop.f32.mrb[0].mxu0
  %1273 = vmatprep.mubr.bf16.mxu0 0
  %1274 = vmatmul.mubr.bf16.gmra.mrb[0].mxu0 %v1112
  %v1275 = vpop.f32.mrb[0].mxu0
  %v1276 = vadd.f32 0.0, %v1275
  %v1277 = vpop.f32.mrb[0].mxu0
  %v1278 = vpop.f32.mrb[0].mxu0
  %v1279 = vadd.f32 0.0, %v1278
  %v1280 = vpop.f32.mrb[0].mxu0
  %1281 = vmatprep.mubr.bf16.mxu0 0
  %1282 = vmatmul.mubr.bf16.gmra.mrb[0].mxu0 %v1115
  %v1283 = vpop.f32.mrb[0].mxu0
  %v1284 = vadd.f32 0.0, %v1283
  %v1285 = vpop.f32.mrb[0].mxu0
  %v1286 = vpop.f32.mrb[0].mxu0
  %v1287 = vadd.f32 0.0, %v1286
  %v1288 = vpop.f32.mrb[0].mxu0
  %1289 = vmatprep.mubr.bf16.mxu0 0
  %1290 = vmatmul.mubr.bf16.gmra.mrb[0].mxu0 %v1118
  %v1291 = vpop.f32.mrb[0].mxu0
  %v1292 = vadd.f32 0.0, %v1291
  %v1293 = vpop.f32.mrb[0].mxu0
  %v1294 = vpop.f32.mrb[0].mxu0
  %v1295 = vadd.f32 0.0, %v1294
  %v1296 = vpop.f32.mrb[0].mxu0
  %1297 = vmatprep.mubr.bf16.mxu0 0
  %1298 = vmatmul.mubr.bf16.gmra.mrb[0].mxu0 %v1121
  %v1299 = vpop.f32.mrb[0].mxu0
  %v1300 = vadd.f32 0.0, %v1299
  %v1301 = vpop.f32.mrb[0].mxu0
  %v1302 = vpop.f32.mrb[0].mxu0
  %v1303 = vadd.f32 0.0, %v1302
  %v1304 = vpop.f32.mrb[0].mxu0
  %1305 = vmatprep.mubr.bf16.mxu0 0
  %1306 = vmatmul.mubr.bf16.gmra.mrb[0].mxu0 %v1124
  %v1307 = vpop.f32.mrb[0].mxu0
  %v1308 = vadd.f32 0.0, %v1307
  %v1309 = vpop.f32.mrb[0].mxu0
  %v1310 = vpop.f32.mrb[0].mxu0
  %v1311 = vadd.f32 0.0, %v1310
  %v1312 = vpop.f32.mrb[0].mxu0
  %1313 = vmatprep.mubr.bf16.mxu0 0
  %1314 = vmatmul.mubr.bf16.gmra.mrb[0].mxu0 %v1127
  %v1315 = vpop.f32.mrb[0].mxu0
  %v1316 = vadd.f32 0.0, %v1315
  %v1317 = vpop.f32.mrb[0].mxu0
  %v1318 = vpop.f32.mrb[0].mxu0
  %v1319 = vadd.f32 0.0, %v1318
  %v1320 = vpop.f32.mrb[0].mxu0
  %1321 = vmatprep.mubr.bf16.mxu0 0
  %1322 = vmatmul.mubr.bf16.gmra.mrb[0].mxu0 %v1130
  %v1323 = vpop.f32.mrb[0].mxu0
  %v1324 = vadd.f32 0.0, %v1323
  %v1325 = vpop.f32.mrb[0].mxu0
  %v1326 = vpop.f32.mrb[0].mxu0
  %v1327 = vadd.f32 0.0, %v1326
  %v1328 = vpop.f32.mrb[0].mxu0
  %1329 = vmatprep.mubr.bf16.mxu0 0
  %1330 = vmatmul.mubr.bf16.gmra.mrb[0].mxu0 %v1133
  %v1331 = vpop.f32.mrb[0].mxu0
  %v1332 = vadd.f32 0.0, %v1331
  %v1333 = vpop.f32.mrb[0].mxu0
  %v1334 = vpop.f32.mrb[0].mxu0
  %v1335 = vadd.f32 0.0, %v1334
  %v1336 = vpop.f32.mrb[0].mxu0
  %1337 = vmatprep.mubr.bf16.mxu0 0
  %1338 = vmatmul.mubr.bf16.gmra.mrb[0].mxu0 %v1136
  %v1339 = vpop.f32.mrb[0].mxu0
  %v1340 = vadd.f32 0.0, %v1339
  %v1341 = vpop.f32.mrb[0].mxu0
  %v1342 = vpop.f32.mrb[0].mxu0
  %v1343 = vadd.f32 0.0, %v1342
  %v1344 = vpop.f32.mrb[0].mxu0
  %1345 = vmatprep.mubr.bf16.mxu0 0
  %1346 = vmatmul.mubr.bf16.gmra.mrb[0].mxu0 %v1139
  %v1347 = vpop.f32.mrb[0].mxu0
  %v1348 = vadd.f32 0.0, %v1347
  %v1349 = vpop.f32.mrb[0].mxu0
  %v1350 = vpop.f32.mrb[0].mxu0
  %v1351 = vadd.f32 0.0, %v1350
  %v1352 = vpop.f32.mrb[0].mxu0
  %1353 = vmatprep.mubr.bf16.mxu0 0
  %1354 = vmatmul.mubr.bf16.gmra.mrb[0].mxu0 %v1142
  %v1355 = vpop.f32.mrb[0].mxu0
  %v1356 = vadd.f32 0.0, %v1355
  %v1357 = vpop.f32.mrb[0].mxu0
  %v1358 = vpop.f32.mrb[0].mxu0
  %v1359 = vadd.f32 0.0, %v1358
  %v1360 = vpop.f32.mrb[0].mxu0
  %1361 = vmatprep.mubr.bf16.mxu0 0
  %1362 = vmatmul.mubr.bf16.gmra.mrb[0].mxu0 %v1145
  %v1363 = vpop.f32.mrb[0].mxu0
  %v1364 = vadd.f32 0.0, %v1363
  %v1365 = vpop.f32.mrb[0].mxu0
  %v1366 = vpop.f32.mrb[0].mxu0
  %v1367 = vadd.f32 0.0, %v1366
  %v1368 = vpop.f32.mrb[0].mxu0
  %1369 = vmatprep.mubr.bf16.mxu0 0
  %1370 = vmatmul.mubr.bf16.gmra.mrb[0].mxu0 %v1148
  %v1371 = vpop.f32.mrb[0].mxu0
  %v1372 = vadd.f32 0.0, %v1371
  %v1373 = vpop.f32.mrb[0].mxu0
  %v1374 = vpop.f32.mrb[0].mxu0
  %v1375 = vadd.f32 0.0, %v1374
  %v1376 = vpop.f32.mrb[0].mxu0
  %1377 = vmatprep.mubr.bf16.mxu0 0
  %1378 = vmatmul.mubr.bf16.gmra.mrb[0].mxu0 %v1151
  %v1379 = vpop.f32.mrb[0].mxu0
  %v1380 = vadd.f32 0.0, %v1379
  %v1381 = vpop.f32.mrb[0].mxu0
  %v1382 = vpop.f32.mrb[0].mxu0
  %v1383 = vadd.f32 0.0, %v1382
  %v1384 = vpop.f32.mrb[0].mxu0
  %1385 = vmatprep.mubr.bf16.mxu0 0
  %1386 = vmatmul.mubr.bf16.gmra.mrb[0].mxu0 %v1154
  %v1387 = vpop.f32.mrb[0].mxu0
  %v1388 = vadd.f32 0.0, %v1387
  %v1389 = vpop.f32.mrb[0].mxu0
  %v1390 = vpop.f32.mrb[0].mxu0
  %v1391 = vadd.f32 0.0, %v1390
  %v1392 = vpop.f32.mrb[0].mxu0
  %1393 = vmatprep.mubr.bf16.mxu0 0
  %1394 = vmatmul.mubr.bf16.gmra.mrb[0].mxu0 %v1157
  %v1395 = vpop.f32.mrb[0].mxu0
  %v1396 = vadd.f32 0.0, %v1395
  %v1397 = vpop.f32.mrb[0].mxu0
  %v1398 = vpop.f32.mrb[0].mxu0
  %v1399 = vadd.f32 0.0, %v1398
  %v1400 = vpop.f32.mrb[0].mxu0
  %1401 = vmatprep.mubr.bf16.mxu0 0
  %1402 = vmatmul.mubr.bf16.gmra.mrb[0].mxu0 %v1160
  %v1403 = vpop.f32.mrb[0].mxu0
  %v1404 = vadd.f32 0.0, %v1403
  %v1405 = vpop.f32.mrb[0].mxu0
  %v1406 = vpop.f32.mrb[0].mxu0
  %v1407 = vadd.f32 0.0, %v1406
  %v1408 = vpop.f32.mrb[0].mxu0
  %1409 = vmatprep.mubr.bf16.mxu0 0
  %1410 = vmatmul.mubr.bf16.gmra.mrb[0].mxu0 %v1163
  %v1411 = vpop.f32.mrb[0].mxu0
  %v1412 = vadd.f32 0.0, %v1411
  %v1413 = vpop.f32.mrb[0].mxu0
  %v1414 = vpop.f32.mrb[0].mxu0
  %v1415 = vadd.f32 0.0, %v1414
  %v1416 = vpop.f32.mrb[0].mxu0
  %1417 = vmatprep.mubr.bf16.mxu0 0
  %1418 = vmatmul.mubr.bf16.gmra.mrb[0].mxu0 %v1166
  %v1419 = vpop.f32.mrb[0].mxu0
  %v1420 = vadd.f32 0.0, %v1419
  %v1421 = vpop.f32.mrb[0].mxu0
  %v1422 = vpop.f32.mrb[0].mxu0
  %v1423 = vadd.f32 0.0, %v1422
  %v1424 = vpop.f32.mrb[0].mxu0
  %1425 = vmatprep.mubr.bf16.mxu0 0
  %1426 = vmatmul.mubr.bf16.gmra.mrb[0].mxu0 %v1169
  %v1427 = vpop.f32.mrb[0].mxu0
  %v1428 = vadd.f32 0.0, %v1427
  %v1429 = vpop.f32.mrb[0].mxu0
  %v1430 = vpop.f32.mrb[0].mxu0
  %v1431 = vadd.f32 0.0, %v1430
  %v1432 = vpop.f32.mrb[0].mxu0
  %1433 = vmatprep.mubr.bf16.mxu0 0
  %1434 = vmatmul.mubr.bf16.gmra.mrb[0].mxu0 %v1172
  %v1435 = vpop.f32.mrb[0].mxu0
  %v1436 = vadd.f32 0.0, %v1435
  %v1437 = vpop.f32.mrb[0].mxu0
  %v1438 = vpop.f32.mrb[0].mxu0
  %v1439 = vadd.f32 0.0, %v1438
  %v1440 = vpop.f32.mrb[0].mxu0
  %1441 = vmatprep.mubr.bf16.mxu0 0
  %1442 = vmatmul.mubr.bf16.gmra.mrb[0].mxu0 %v1175
  %v1443 = vpop.f32.mrb[0].mxu0
  %v1444 = vadd.f32 0.0, %v1443
  %v1445 = vpop.f32.mrb[0].mxu0
  %v1446 = vpop.f32.mrb[0].mxu0
  %v1447 = vadd.f32 0.0, %v1446
  %v1448 = vpop.f32.mrb[0].mxu0
  %1449 = vmatprep.mubr.bf16.mxu0 0
  %1450 = vmatmul.mubr.bf16.gmra.mrb[0].mxu0 %v1178
  %v1451 = vpop.f32.mrb[0].mxu0
  %v1452 = vadd.f32 0.0, %v1451
  %v1453 = vpop.f32.mrb[0].mxu0
  %v1454 = vpop.f32.mrb[0].mxu0
  %v1455 = vadd.f32 0.0, %v1454
  %v1456 = vpop.f32.mrb[0].mxu0
  %1457 = vmatprep.mubr.bf16.mxu0 0
  %1458 = vmatmul.mubr.bf16.gmra.mrb[0].mxu0 %v1181
  %v1459 = vpop.f32.mrb[0].mxu0
  %v1460 = vadd.f32 0.0, %v1459
  %v1461 = vpop.f32.mrb[0].mxu0
  %v1462 = vpop.f32.mrb[0].mxu0
  %v1463 = vadd.f32 0.0, %v1462
  %v1464 = vpop.f32.mrb[0].mxu0
  %1465 = vmatprep.mubr.bf16.mxu0 0
  %1466 = vmatmul.mubr.bf16.gmra.mrb[0].mxu0 %v1184
  %v1467 = vpop.f32.mrb[0].mxu0
  %v1468 = vadd.f32 0.0, %v1467
  %v1469 = vpop.f32.mrb[0].mxu0
  %v1470 = vpop.f32.mrb[0].mxu0
  %v1471 = vadd.f32 0.0, %v1470
  %v1472 = vpop.f32.mrb[0].mxu0
  %1473 = vmatprep.mubr.bf16.mxu0 0
  %1474 = vmatmul.mubr.bf16.gmra.mrb[0].mxu0 %v1187
  %v1475 = vpop.f32.mrb[0].mxu0
  %v1476 = vadd.f32 0.0, %v1475
  %v1477 = vpop.f32.mrb[0].mxu0
  %v1478 = vpop.f32.mrb[0].mxu0
  %v1479 = vadd.f32 0.0, %v1478
  %v1480 = vpop.f32.mrb[0].mxu0
  %1481 = vdwg.mxu0
  %v1482 = vpack.c.bf16 %v1231, %v1228
  %v1483 = vpack.c.bf16 %v1239, %v1236
  %v1484 = vpack.c.bf16 %v1247, %v1244
  %v1485 = vpack.c.bf16 %v1255, %v1252
  %v1486 = vpack.c.bf16 %v1263, %v1260
  %v1487 = vpack.c.bf16 %v1271, %v1268
  %v1488 = vpack.c.bf16 %v1279, %v1276
  %v1489 = vpack.c.bf16 %v1287, %v1284
  %v1490 = vpack.c.bf16 %v1295, %v1292
  %v1491 = vpack.c.bf16 %v1303, %v1300
  %v1492 = vpack.c.bf16 %v1311, %v1308
  %v1493 = vpack.c.bf16 %v1319, %v1316
  %v1494 = vpack.c.bf16 %v1327, %v1324
  %v1495 = vpack.c.bf16 %v1335, %v1332
  %v1496 = vpack.c.bf16 %v1343, %v1340
  %v1497 = vpack.c.bf16 %v1351, %v1348
  %v1498 = vpack.c.bf16 %v1359, %v1356
  %v1499 = vpack.c.bf16 %v1367, %v1364
  %v1500 = vpack.c.bf16 %v1375, %v1372
  %v1501 = vpack.c.bf16 %v1383, %v1380
  %v1502 = vpack.c.bf16 %v1391, %v1388
  %v1503 = vpack.c.bf16 %v1399, %v1396
  %v1504 = vpack.c.bf16 %v1407, %v1404
  %v1505 = vpack.c.bf16 %v1415, %v1412
  %v1506 = vpack.c.bf16 %v1423, %v1420
  %v1507 = vpack.c.bf16 %v1431, %v1428
  %v1508 = vpack.c.bf16 %v1439, %v1436
  %v1509 = vpack.c.bf16 %v1447, %v1444
  %v1510 = vpack.c.bf16 %v1455, %v1452
  %v1511 = vpack.c.bf16 %v1463, %v1460
  %v1512 = vpack.c.bf16 %v1471, %v1468
  %v1513 = vpack.c.bf16 %v1479, %v1476
  %v1546 = vunpack.c.l.b16 %v1482
  %v1547 = vunpack.c.h.b16 %v1482
  %v1548 = vunpack.c.l.b16 %v1483
  %v1549 = vunpack.c.h.b16 %v1483
  %v1550 = vunpack.c.l.b16 %v1484
  %v1551 = vunpack.c.h.b16 %v1484
  %v1552 = vunpack.c.l.b16 %v1485
  %v1553 = vunpack.c.h.b16 %v1485
  %v1554 = vunpack.c.l.b16 %v1486
  %v1555 = vunpack.c.h.b16 %v1486
  %v1556 = vunpack.c.l.b16 %v1487
  %v1557 = vunpack.c.h.b16 %v1487
  %v1558 = vunpack.c.l.b16 %v1488
  %v1559 = vunpack.c.h.b16 %v1488
  %v1560 = vunpack.c.l.b16 %v1489
  %v1561 = vunpack.c.h.b16 %v1489
  %v1562 = vunpack.c.l.b16 %v1490
  %v1563 = vunpack.c.h.b16 %v1490
  %v1564 = vunpack.c.l.b16 %v1491
  %v1565 = vunpack.c.h.b16 %v1491
  %v1566 = vunpack.c.l.b16 %v1492
  %v1567 = vunpack.c.h.b16 %v1492
  %v1568 = vunpack.c.l.b16 %v1493
  %v1569 = vunpack.c.h.b16 %v1493
  %v1570 = vunpack.c.l.b16 %v1494
  %v1571 = vunpack.c.h.b16 %v1494
  %v1572 = vunpack.c.l.b16 %v1495
  %v1573 = vunpack.c.h.b16 %v1495
  %v1574 = vunpack.c.l.b16 %v1496
  %v1575 = vunpack.c.h.b16 %v1496
  %v1576 = vunpack.c.l.b16 %v1497
  %v1577 = vunpack.c.h.b16 %v1497
  %v1578 = vunpack.c.l.b16 %v1498
  %v1579 = vunpack.c.h.b16 %v1498
  %v1580 = vunpack.c.l.b16 %v1499
  %v1581 = vunpack.c.h.b16 %v1499
  %v1582 = vunpack.c.l.b16 %v1500
  %v1583 = vunpack.c.h.b16 %v1500
  %v1584 = vunpack.c.l.b16 %v1501
  %v1585 = vunpack.c.h.b16 %v1501
  %v1586 = vunpack.c.l.b16 %v1502
  %v1587 = vunpack.c.h.b16 %v1502
  %v1588 = vunpack.c.l.b16 %v1503
  %v1589 = vunpack.c.h.b16 %v1503
  %v1590 = vunpack.c.l.b16 %v1504
  %v1591 = vunpack.c.h.b16 %v1504
  %v1592 = vunpack.c.l.b16 %v1505
  %v1593 = vunpack.c.h.b16 %v1505
  %v1594 = vunpack.c.l.b16 %v1506
  %v1595 = vunpack.c.h.b16 %v1506
  %v1596 = vunpack.c.l.b16 %v1507
  %v1597 = vunpack.c.h.b16 %v1507
  %v1598 = vunpack.c.l.b16 %v1508
  %v1599 = vunpack.c.h.b16 %v1508
  %v1600 = vunpack.c.l.b16 %v1509
  %v1601 = vunpack.c.h.b16 %v1509
  %v1602 = vunpack.c.l.b16 %v1510
  %v1603 = vunpack.c.h.b16 %v1510
  %v1604 = vunpack.c.l.b16 %v1511
  %v1605 = vunpack.c.h.b16 %v1511
  %v1606 = vunpack.c.l.b16 %v1512
  %v1607 = vunpack.c.h.b16 %v1512
  %v1608 = vunpack.c.l.b16 %v1513
  %v1609 = vunpack.c.h.b16 %v1513
  %v1610 = vpack.c.b16 %v1546, %v1546
  %v1611 = vpack.c.b16 %v1547, %v1547
  %v1612 = vpack.c.b16 %v1548, %v1548
  %v1613 = vpack.c.b16 %v1549, %v1549
  %v1614 = vpack.c.b16 %v1550, %v1550
  %v1615 = vpack.c.b16 %v1551, %v1551
  %v1616 = vpack.c.b16 %v1552, %v1552
  %v1617 = vpack.c.b16 %v1553, %v1553
  %v1618 = vpack.c.b16 %v1554, %v1554
  %v1619 = vpack.c.b16 %v1555, %v1555
  %v1620 = vpack.c.b16 %v1556, %v1556
  %v1621 = vpack.c.b16 %v1557, %v1557
  %v1622 = vpack.c.b16 %v1558, %v1558
  %v1623 = vpack.c.b16 %v1559, %v1559
  %v1624 = vpack.c.b16 %v1560, %v1560
  %v1625 = vpack.c.b16 %v1561, %v1561
  %v1626 = vpack.c.b16 %v1562, %v1562
  %v1627 = vpack.c.b16 %v1563, %v1563
  %v1628 = vpack.c.b16 %v1564, %v1564
  %v1629 = vpack.c.b16 %v1565, %v1565
  %v1630 = vpack.c.b16 %v1566, %v1566
  %v1631 = vpack.c.b16 %v1567, %v1567
  %v1632 = vpack.c.b16 %v1568, %v1568
  %v1633 = vpack.c.b16 %v1569, %v1569
  %v1634 = vpack.c.b16 %v1570, %v1570
  %v1635 = vpack.c.b16 %v1571, %v1571
  %v1636 = vpack.c.b16 %v1572, %v1572
  %v1637 = vpack.c.b16 %v1573, %v1573
  %v1638 = vpack.c.b16 %v1574, %v1574
  %v1639 = vpack.c.b16 %v1575, %v1575
  %v1640 = vpack.c.b16 %v1576, %v1576
  %v1641 = vpack.c.b16 %v1577, %v1577
  %v1642 = vpack.c.b16 %v1578, %v1578
  %v1643 = vpack.c.b16 %v1579, %v1579
  %v1644 = vpack.c.b16 %v1580, %v1580
  %v1645 = vpack.c.b16 %v1581, %v1581
  %v1646 = vpack.c.b16 %v1582, %v1582
  %v1647 = vpack.c.b16 %v1583, %v1583
  %v1648 = vpack.c.b16 %v1584, %v1584
  %v1649 = vpack.c.b16 %v1585, %v1585
  %v1650 = vpack.c.b16 %v1586, %v1586
  %v1651 = vpack.c.b16 %v1587, %v1587
  %v1652 = vpack.c.b16 %v1588, %v1588
  %v1653 = vpack.c.b16 %v1589, %v1589
  %v1654 = vpack.c.b16 %v1590, %v1590
  %v1655 = vpack.c.b16 %v1591, %v1591
  %v1656 = vpack.c.b16 %v1592, %v1592
  %v1657 = vpack.c.b16 %v1593, %v1593
  %v1658 = vpack.c.b16 %v1594, %v1594
  %v1659 = vpack.c.b16 %v1595, %v1595
  %v1660 = vpack.c.b16 %v1596, %v1596
  %v1661 = vpack.c.b16 %v1597, %v1597
  %v1662 = vpack.c.b16 %v1598, %v1598
  %v1663 = vpack.c.b16 %v1599, %v1599
  %v1664 = vpack.c.b16 %v1600, %v1600
  %v1665 = vpack.c.b16 %v1601, %v1601
  %v1666 = vpack.c.b16 %v1602, %v1602
  %v1667 = vpack.c.b16 %v1603, %v1603
  %v1668 = vpack.c.b16 %v1604, %v1604
  %v1669 = vpack.c.b16 %v1605, %v1605
  %v1670 = vpack.c.b16 %v1606, %v1606
  %v1671 = vpack.c.b16 %v1607, %v1607
  %v1672 = vpack.c.b16 %v1608, %v1608
  %v1673 = vpack.c.b16 %v1609, %v1609
  %vm1738 = vcmask 60416
  %1739 = vst.msk [vmem:[%s4] sm:$0xf] %vm1738, %v1610
  %1740 = vst.msk [vmem:[%s4 + $0x4] sm:$0xf] %vm1738, %v1611
  %1741 = vst.msk [vmem:[%s4 + $0x8] sm:$0xf] %vm1738, %v1612
  %1742 = vst.msk [vmem:[%s4 + $0xc] sm:$0xf] %vm1738, %v1613
  %1743 = vst.msk [vmem:[%s4 + $0x10] sm:$0xf] %vm1738, %v1614
  %1744 = vst.msk [vmem:[%s4 + $0x14] sm:$0xf] %vm1738, %v1615
  %1745 = vst.msk [vmem:[%s4 + $0x18] sm:$0xf] %vm1738, %v1616
  %1746 = vst.msk [vmem:[%s4 + $0x1c] sm:$0xf] %vm1738, %v1617
  %1747 = vst.msk [vmem:[%s4 + $0x20] sm:$0xf] %vm1738, %v1618
  %1748 = vst.msk [vmem:[%s4 + $0x24] sm:$0xf] %vm1738, %v1619
  %1749 = vst.msk [vmem:[%s4 + $0x28] sm:$0xf] %vm1738, %v1620
  %1750 = vst.msk [vmem:[%s4 + $0x2c] sm:$0xf] %vm1738, %v1621
  %1751 = vst.msk [vmem:[%s4 + $0x30] sm:$0xf] %vm1738, %v1622
  %1752 = vst.msk [vmem:[%s4 + $0x34] sm:$0xf] %vm1738, %v1623
  %1753 = vst.msk [vmem:[%s4 + $0x38] sm:$0xf] %vm1738, %v1624
  %1754 = vst.msk [vmem:[%s4 + $0x3c] sm:$0xf] %vm1738, %v1625
  %1755 = vst.msk [vmem:[%s4 + $0x40] sm:$0xf] %vm1738, %v1626
  %1756 = vst.msk [vmem:[%s4 + $0x44] sm:$0xf] %vm1738, %v1627
  %1757 = vst.msk [vmem:[%s4 + $0x48] sm:$0xf] %vm1738, %v1628
  %1758 = vst.msk [vmem:[%s4 + $0x4c] sm:$0xf] %vm1738, %v1629
  %1759 = vst.msk [vmem:[%s4 + $0x50] sm:$0xf] %vm1738, %v1630
  %1760 = vst.msk [vmem:[%s4 + $0x54] sm:$0xf] %vm1738, %v1631
  %1761 = vst.msk [vmem:[%s4 + $0x58] sm:$0xf] %vm1738, %v1632
  %1762 = vst.msk [vmem:[%s4 + $0x5c] sm:$0xf] %vm1738, %v1633
  %1763 = vst.msk [vmem:[%s4 + $0x60] sm:$0xf] %vm1738, %v1634
  %1764 = vst.msk [vmem:[%s4 + $0x64] sm:$0xf] %vm1738, %v1635
  %1765 = vst.msk [vmem:[%s4 + $0x68] sm:$0xf] %vm1738, %v1636
  %1766 = vst.msk [vmem:[%s4 + $0x6c] sm:$0xf] %vm1738, %v1637
  %1767 = vst.msk [vmem:[%s4 + $0x70] sm:$0xf] %vm1738, %v1638
  %1768 = vst.msk [vmem:[%s4 + $0x74] sm:$0xf] %vm1738, %v1639
  %1769 = vst.msk [vmem:[%s4 + $0x78] sm:$0xf] %vm1738, %v1640
  %1770 = vst.msk [vmem:[%s4 + $0x7c] sm:$0xf] %vm1738, %v1641
  %1771 = vst.msk [vmem:[%s4 + $0x80] sm:$0xf] %vm1738, %v1642
  %1772 = vst.msk [vmem:[%s4 + $0x84] sm:$0xf] %vm1738, %v1643
  %1773 = vst.msk [vmem:[%s4 + $0x88] sm:$0xf] %vm1738, %v1644
  %1774 = vst.msk [vmem:[%s4 + $0x8c] sm:$0xf] %vm1738, %v1645
  %1775 = vst.msk [vmem:[%s4 + $0x90] sm:$0xf] %vm1738, %v1646
  %1776 = vst.msk [vmem:[%s4 + $0x94] sm:$0xf] %vm1738, %v1647
  %1777 = vst.msk [vmem:[%s4 + $0x98] sm:$0xf] %vm1738, %v1648
  %1778 = vst.msk [vmem:[%s4 + $0x9c] sm:$0xf] %vm1738, %v1649
  %1779 = vst.msk [vmem:[%s4 + $0xa0] sm:$0xf] %vm1738, %v1650
  %1780 = vst.msk [vmem:[%s4 + $0xa4] sm:$0xf] %vm1738, %v1651
  %1781 = vst.msk [vmem:[%s4 + $0xa8] sm:$0xf] %vm1738, %v1652
  %1782 = vst.msk [vmem:[%s4 + $0xac] sm:$0xf] %vm1738, %v1653
  %1783 = vst.msk [vmem:[%s4 + $0xb0] sm:$0xf] %vm1738, %v1654
  %1784 = vst.msk [vmem:[%s4 + $0xb4] sm:$0xf] %vm1738, %v1655
  %1785 = vst.msk [vmem:[%s4 + $0xb8] sm:$0xf] %vm1738, %v1656
  %1786 = vst.msk [vmem:[%s4 + $0xbc] sm:$0xf] %vm1738, %v1657
  %1787 = vst.msk [vmem:[%s4 + $0xc0] sm:$0xf] %vm1738, %v1658
  %1788 = vst.msk [vmem:[%s4 + $0xc4] sm:$0xf] %vm1738, %v1659
  %1789 = vst.msk [vmem:[%s4 + $0xc8] sm:$0xf] %vm1738, %v1660
  %1790 = vst.msk [vmem:[%s4 + $0xcc] sm:$0xf] %vm1738, %v1661
  %1791 = vst.msk [vmem:[%s4 + $0xd0] sm:$0xf] %vm1738, %v1662
  %1792 = vst.msk [vmem:[%s4 + $0xd4] sm:$0xf] %vm1738, %v1663
  %1793 = vst.msk [vmem:[%s4 + $0xd8] sm:$0xf] %vm1738, %v1664
  %1794 = vst.msk [vmem:[%s4 + $0xdc] sm:$0xf] %vm1738, %v1665
  %1795 = vst.msk [vmem:[%s4 + $0xe0] sm:$0xf] %vm1738, %v1666
  %1796 = vst.msk [vmem:[%s4 + $0xe4] sm:$0xf] %vm1738, %v1667
  %1797 = vst.msk [vmem:[%s4 + $0xe8] sm:$0xf] %vm1738, %v1668
  %1798 = vst.msk [vmem:[%s4 + $0xec] sm:$0xf] %vm1738, %v1669
  %1799 = vst.msk [vmem:[%s4 + $0xf0] sm:$0xf] %vm1738, %v1670
  %1800 = vst.msk [vmem:[%s4 + $0xf4] sm:$0xf] %vm1738, %v1671
  %1801 = vst.msk [vmem:[%s4 + $0xf8] sm:$0xf] %vm1738, %v1672
  %1802 = vst.msk [vmem:[%s4 + $0xfc] sm:$0xf] %vm1738, %v1673
  %1803 = vrot.lane.b32.xlu0 %v1610, 120
  %v1804 = vpop.permute.xlu0 %1803
  %1805 = vrot.lane.b32.xlu0 %v1611, 120
  %v1806 = vpop.permute.xlu0 %1805
  %1807 = vrot.lane.b32.xlu0 %v1612, 120
  %v1808 = vpop.permute.xlu0 %1807
  %1809 = vrot.lane.b32.xlu0 %v1613, 120
  %v1810 = vpop.permute.xlu0 %1809
  %1811 = vrot.lane.b32.xlu0 %v1614, 120
  %v1812 = vpop.permute.xlu0 %1811
  %1813 = vrot.lane.b32.xlu0 %v1615, 120
  %v1814 = vpop.permute.xlu0 %1813
  %1815 = vrot.lane.b32.xlu0 %v1616, 120
  %v1816 = vpop.permute.xlu0 %1815
  %1817 = vrot.lane.b32.xlu0 %v1617, 120
  %v1818 = vpop.permute.xlu0 %1817
  %1819 = vrot.lane.b32.xlu0 %v1618, 120
  %v1820 = vpop.permute.xlu0 %1819
  %1821 = vrot.lane.b32.xlu0 %v1619, 120
  %v1822 = vpop.permute.xlu0 %1821
  %1823 = vrot.lane.b32.xlu0 %v1620, 120
  %v1824 = vpop.permute.xlu0 %1823
  %1825 = vrot.lane.b32.xlu0 %v1621, 120
  %v1826 = vpop.permute.xlu0 %1825
  %1827 = vrot.lane.b32.xlu0 %v1622, 120
  %v1828 = vpop.permute.xlu0 %1827
  %1829 = vrot.lane.b32.xlu0 %v1623, 120
  %v1830 = vpop.permute.xlu0 %1829
  %1831 = vrot.lane.b32.xlu0 %v1624, 120
  %v1832 = vpop.permute.xlu0 %1831
  %1833 = vrot.lane.b32.xlu0 %v1625, 120
  %v1834 = vpop.permute.xlu0 %1833
  %1835 = vrot.lane.b32.xlu0 %v1626, 120
  %v1836 = vpop.permute.xlu0 %1835
  %1837 = vrot.lane.b32.xlu0 %v1627, 120
  %v1838 = vpop.permute.xlu0 %1837
  %1839 = vrot.lane.b32.xlu0 %v1628, 120
  %v1840 = vpop.permute.xlu0 %1839
  %1841 = vrot.lane.b32.xlu0 %v1629, 120
  %v1842 = vpop.permute.xlu0 %1841
  %1843 = vrot.lane.b32.xlu0 %v1630, 120
  %v1844 = vpop.permute.xlu0 %1843
  %1845 = vrot.lane.b32.xlu0 %v1631, 120
  %v1846 = vpop.permute.xlu0 %1845
  %1847 = vrot.lane.b32.xlu0 %v1632, 120
  %v1848 = vpop.permute.xlu0 %1847
  %1849 = vrot.lane.b32.xlu0 %v1633, 120
  %v1850 = vpop.permute.xlu0 %1849
  %1851 = vrot.lane.b32.xlu0 %v1634, 120
  %v1852 = vpop.permute.xlu0 %1851
  %1853 = vrot.lane.b32.xlu0 %v1635, 120
  %v1854 = vpop.permute.xlu0 %1853
  %1855 = vrot.lane.b32.xlu0 %v1636, 120
  %v1856 = vpop.permute.xlu0 %1855
  %1857 = vrot.lane.b32.xlu0 %v1637, 120
  %v1858 = vpop.permute.xlu0 %1857
  %1859 = vrot.lane.b32.xlu0 %v1638, 120
  %v1860 = vpop.permute.xlu0 %1859
  %1861 = vrot.lane.b32.xlu0 %v1639, 120
  %v1862 = vpop.permute.xlu0 %1861
  %1863 = vrot.lane.b32.xlu0 %v1640, 120
  %v1864 = vpop.permute.xlu0 %1863
  %1865 = vrot.lane.b32.xlu0 %v1641, 120
  %v1866 = vpop.permute.xlu0 %1865
  %1867 = vrot.lane.b32.xlu0 %v1642, 120
  %v1868 = vpop.permute.xlu0 %1867
  %1869 = vrot.lane.b32.xlu0 %v1643, 120
  %v1870 = vpop.permute.xlu0 %1869
  %1871 = vrot.lane.b32.xlu0 %v1644, 120
  %v1872 = vpop.permute.xlu0 %1871
  %1873 = vrot.lane.b32.xlu0 %v1645, 120
  %v1874 = vpop.permute.xlu0 %1873
  %1875 = vrot.lane.b32.xlu0 %v1646, 120
  %v1876 = vpop.permute.xlu0 %1875
  %1877 = vrot.lane.b32.xlu0 %v1647, 120
  %v1878 = vpop.permute.xlu0 %1877
  %1879 = vrot.lane.b32.xlu0 %v1648, 120
  %v1880 = vpop.permute.xlu0 %1879
  %1881 = vrot.lane.b32.xlu0 %v1649, 120
  %v1882 = vpop.permute.xlu0 %1881
  %1883 = vrot.lane.b32.xlu0 %v1650, 120
  %v1884 = vpop.permute.xlu0 %1883
  %1885 = vrot.lane.b32.xlu0 %v1651, 120
  %v1886 = vpop.permute.xlu0 %1885
  %1887 = vrot.lane.b32.xlu0 %v1652, 120
  %v1888 = vpop.permute.xlu0 %1887
  %1889 = vrot.lane.b32.xlu0 %v1653, 120
  %v1890 = vpop.permute.xlu0 %1889
  %1891 = vrot.lane.b32.xlu0 %v1654, 120
  %v1892 = vpop.permute.xlu0 %1891
  %1893 = vrot.lane.b32.xlu0 %v1655, 120
  %v1894 = vpop.permute.xlu0 %1893
  %1895 = vrot.lane.b32.xlu0 %v1656, 120
  %v1896 = vpop.permute.xlu0 %1895
  %1897 = vrot.lane.b32.xlu0 %v1657, 120
  %v1898 = vpop.permute.xlu0 %1897
  %1899 = vrot.lane.b32.xlu0 %v1658, 120
  %v1900 = vpop.permute.xlu0 %1899
  %1901 = vrot.lane.b32.xlu0 %v1659, 120
  %v1902 = vpop.permute.xlu0 %1901
  %1903 = vrot.lane.b32.xlu0 %v1660, 120
  %v1904 = vpop.permute.xlu0 %1903
  %1905 = vrot.lane.b32.xlu0 %v1661, 120
  %v1906 = vpop.permute.xlu0 %1905
  %1907 = vrot.lane.b32.xlu0 %v1662, 120
  %v1908 = vpop.permute.xlu0 %1907
  %1909 = vrot.lane.b32.xlu0 %v1663, 120
  %v1910 = vpop.permute.xlu0 %1909
  %1911 = vrot.lane.b32.xlu0 %v1664, 120
  %v1912 = vpop.permute.xlu0 %1911
  %1913 = vrot.lane.b32.xlu0 %v1665, 120
  %v1914 = vpop.permute.xlu0 %1913
  %1915 = vrot.lane.b32.xlu0 %v1666, 120
  %v1916 = vpop.permute.xlu0 %1915
  %1917 = vrot.lane.b32.xlu0 %v1667, 120
  %v1918 = vpop.permute.xlu0 %1917
  %1919 = vrot.lane.b32.xlu0 %v1668, 120
  %v1920 = vpop.permute.xlu0 %1919
  %1921 = vrot.lane.b32.xlu0 %v1669, 120
  %v1922 = vpop.permute.xlu0 %1921
  %1923 = vrot.lane.b32.xlu0 %v1670, 120
  %v1924 = vpop.permute.xlu0 %1923
  %1925 = vrot.lane.b32.xlu0 %v1671, 120
  %v1926 = vpop.permute.xlu0 %1925
  %1927 = vrot.lane.b32.xlu0 %v1672, 120
  %v1928 = vpop.permute.xlu0 %1927
  %1929 = vrot.lane.b32.xlu0 %v1673, 120
  %v1930 = vpop.permute.xlu0 %1929
  %1995 = vst.msk [vmem:[%s5] sm:$0xf] %vm1738, %v1804
  %1996 = vst.msk [vmem:[%s5 + $0x4] sm:$0xf] %vm1738, %v1806
  %1997 = vst.msk [vmem:[%s5 + $0x8] sm:$0xf] %vm1738, %v1808
  %1998 = vst.msk [vmem:[%s5 + $0xc] sm:$0xf] %vm1738, %v1810
  %1999 = vst.msk [vmem:[%s5 + $0x10] sm:$0xf] %vm1738, %v1812
  %2000 = vst.msk [vmem:[%s5 + $0x14] sm:$0xf] %vm1738, %v1814
  %2001 = vst.msk [vmem:[%s5 + $0x18] sm:$0xf] %vm1738, %v1816
  %2002 = vst.msk [vmem:[%s5 + $0x1c] sm:$0xf] %vm1738, %v1818
  %2003 = vst.msk [vmem:[%s5 + $0x20] sm:$0xf] %vm1738, %v1820
  %2004 = vst.msk [vmem:[%s5 + $0x24] sm:$0xf] %vm1738, %v1822
  %2005 = vst.msk [vmem:[%s5 + $0x28] sm:$0xf] %vm1738, %v1824
  %2006 = vst.msk [vmem:[%s5 + $0x2c] sm:$0xf] %vm1738, %v1826
  %2007 = vst.msk [vmem:[%s5 + $0x30] sm:$0xf] %vm1738, %v1828
  %2008 = vst.msk [vmem:[%s5 + $0x34] sm:$0xf] %vm1738, %v1830
  %2009 = vst.msk [vmem:[%s5 + $0x38] sm:$0xf] %vm1738, %v1832
  %2010 = vst.msk [vmem:[%s5 + $0x3c] sm:$0xf] %vm1738, %v1834
  %2011 = vst.msk [vmem:[%s5 + $0x40] sm:$0xf] %vm1738, %v1836
  %2012 = vst.msk [vmem:[%s5 + $0x44] sm:$0xf] %vm1738, %v1838
  %2013 = vst.msk [vmem:[%s5 + $0x48] sm:$0xf] %vm1738, %v1840
  %2014 = vst.msk [vmem:[%s5 + $0x4c] sm:$0xf] %vm1738, %v1842
  %2015 = vst.msk [vmem:[%s5 + $0x50] sm:$0xf] %vm1738, %v1844
  %2016 = vst.msk [vmem:[%s5 + $0x54] sm:$0xf] %vm1738, %v1846
  %2017 = vst.msk [vmem:[%s5 + $0x58] sm:$0xf] %vm1738, %v1848
  %2018 = vst.msk [vmem:[%s5 + $0x5c] sm:$0xf] %vm1738, %v1850
  %2019 = vst.msk [vmem:[%s5 + $0x60] sm:$0xf] %vm1738, %v1852
  %2020 = vst.msk [vmem:[%s5 + $0x64] sm:$0xf] %vm1738, %v1854
  %2021 = vst.msk [vmem:[%s5 + $0x68] sm:$0xf] %vm1738, %v1856
  %2022 = vst.msk [vmem:[%s5 + $0x6c] sm:$0xf] %vm1738, %v1858
  %2023 = vst.msk [vmem:[%s5 + $0x70] sm:$0xf] %vm1738, %v1860
  %2024 = vst.msk [vmem:[%s5 + $0x74] sm:$0xf] %vm1738, %v1862
  %2025 = vst.msk [vmem:[%s5 + $0x78] sm:$0xf] %vm1738, %v1864
  %2026 = vst.msk [vmem:[%s5 + $0x7c] sm:$0xf] %vm1738, %v1866
  %2027 = vst.msk [vmem:[%s5 + $0x80] sm:$0xf] %vm1738, %v1868
  %2028 = vst.msk [vmem:[%s5 + $0x84] sm:$0xf] %vm1738, %v1870
  %2029 = vst.msk [vmem:[%s5 + $0x88] sm:$0xf] %vm1738, %v1872
  %2030 = vst.msk [vmem:[%s5 + $0x8c] sm:$0xf] %vm1738, %v1874
  %2031 = vst.msk [vmem:[%s5 + $0x90] sm:$0xf] %vm1738, %v1876
  %2032 = vst.msk [vmem:[%s5 + $0x94] sm:$0xf] %vm1738, %v1878
  %2033 = vst.msk [vmem:[%s5 + $0x98] sm:$0xf] %vm1738, %v1880
  %2034 = vst.msk [vmem:[%s5 + $0x9c] sm:$0xf] %vm1738, %v1882
  %2035 = vst.msk [vmem:[%s5 + $0xa0] sm:$0xf] %vm1738, %v1884
  %2036 = vst.msk [vmem:[%s5 + $0xa4] sm:$0xf] %vm1738, %v1886
  %2037 = vst.msk [vmem:[%s5 + $0xa8] sm:$0xf] %vm1738, %v1888
  %2038 = vst.msk [vmem:[%s5 + $0xac] sm:$0xf] %vm1738, %v1890
  %2039 = vst.msk [vmem:[%s5 + $0xb0] sm:$0xf] %vm1738, %v1892
  %2040 = vst.msk [vmem:[%s5 + $0xb4] sm:$0xf] %vm1738, %v1894
  %2041 = vst.msk [vmem:[%s5 + $0xb8] sm:$0xf] %vm1738, %v1896
  %2042 = vst.msk [vmem:[%s5 + $0xbc] sm:$0xf] %vm1738, %v1898
  %2043 = vst.msk [vmem:[%s5 + $0xc0] sm:$0xf] %vm1738, %v1900
  %2044 = vst.msk [vmem:[%s5 + $0xc4] sm:$0xf] %vm1738, %v1902
  %2045 = vst.msk [vmem:[%s5 + $0xc8] sm:$0xf] %vm1738, %v1904
  %2046 = vst.msk [vmem:[%s5 + $0xcc] sm:$0xf] %vm1738, %v1906
  %2047 = vst.msk [vmem:[%s5 + $0xd0] sm:$0xf] %vm1738, %v1908
  %2048 = vst.msk [vmem:[%s5 + $0xd4] sm:$0xf] %vm1738, %v1910
  %2049 = vst.msk [vmem:[%s5 + $0xd8] sm:$0xf] %vm1738, %v1912
  %2050 = vst.msk [vmem:[%s5 + $0xdc] sm:$0xf] %vm1738, %v1914
  %2051 = vst.msk [vmem:[%s5 + $0xe0] sm:$0xf] %vm1738, %v1916
  %2052 = vst.msk [vmem:[%s5 + $0xe4] sm:$0xf] %vm1738, %v1918
  %2053 = vst.msk [vmem:[%s5 + $0xe8] sm:$0xf] %vm1738, %v1920
  %2054 = vst.msk [vmem:[%s5 + $0xec] sm:$0xf] %vm1738, %v1922
  %2055 = vst.msk [vmem:[%s5 + $0xf0] sm:$0xf] %vm1738, %v1924
  %2056 = vst.msk [vmem:[%s5 + $0xf4] sm:$0xf] %vm1738, %v1926
  %2057 = vst.msk [vmem:[%s5 + $0xf8] sm:$0xf] %vm1738, %v1928
  %2058 = vst.msk [vmem:[%s5 + $0xfc] sm:$0xf] %vm1738, %v1930
  // Predicated region
  $region18: #{tpu_custom_call.1} parent=0 // pred_check
    _
  $region19: #{tpu_custom_call.1} parent=0 // pred_check_branch
    %2060 = sbr.rel (0) target = $region21
  $region20: #{tpu_custom_call.1} parent=0 // pred_region
    _
  $region21: #{tpu_custom_call.1} parent=0 // pred_fallthru
    _
  // Predicated region
  $region22: #{tpu_custom_call.1} parent=0 // pred_check
    _
  $region23: #{tpu_custom_call.1} parent=0 // pred_check_branch
    %2062 = sbr.rel (0) target = $region25
  $region24: #{tpu_custom_call.1} parent=0 // pred_region
    _
  $region25: #{tpu_custom_call.1} parent=0 // pred_fallthru
    _
  // Predicated region
  $region26: #{tpu_custom_call.1} parent=0 // pred_check
    _
  $region27: #{tpu_custom_call.1} parent=0 // pred_check_branch
    %2064 = sbr.rel (0) target = $region29
  $region28: #{tpu_custom_call.1} parent=0 // pred_region
    _
  $region29: #{tpu_custom_call.1} parent=0 // pred_fallthru
    _
  // Predicated region
  $region30: #{tpu_custom_call.1} parent=0 // pred_check
    _
  $region31: #{tpu_custom_call.1} parent=0 // pred_check_branch
    %2066 = sbr.rel (0) target = $region33
  $region32: #{tpu_custom_call.1} parent=0 // pred_region
    _
  $region33: #{tpu_custom_call.1} parent=0 // pred_fallthru
    _

</llo_original>
